<compile_context>
chip_gen: v6e
topology: v6e:2x2x1
jax: 0.10.0
libtpu: 0.0.40
codegen_flags: <defaults>
</compile_context>

<pallas_src>
import functools

import jax
import jax.numpy as jnp
from jax.experimental import pallas as pl
from jax.experimental.pallas import tpu as pltpu

C_IN = 4
C_OUT = 4
POOL = 7
BN_EPS = 1e-5
N_OUT = 1000
N_PAD = 1024   # lane-aligned padded FC output width (sliced back to 1000)
M_PAD = 8      # sublane-aligned padded batch (unmasked stores / MXU rows)


def fused_kernel(x_ref, wc_ref, bc_ref, wf_ref, bf_ref, o_ref, *, w_dim, h_out):
    """1x1 conv(+folded BN) -> ReLU -> H-dir 7-tap pool sum -> MXU matmul.

    x_ref : (4, M_PAD, H*W)  VMEM f32   input, channel-major, batch zero-padded to 8
    wc_ref: (4, 4)           SMEM f32   BN-folded 1x1 conv weight (out_ch, in_ch)
    bc_ref: (4,)             SMEM f32   BN-folded conv bias
    wf_ref: (640, bn)        VMEM bf16  (W-pool + flatten + FC) folded weight block
    bf_ref: (1, bn)          VMEM f32   FC bias block (zero padded past 1000)
    o_ref : (M_PAD, bn)      VMEM f32   padded output block (sliced outside)
    """
    hw_valid = h_out * w_dim                        # 10 * 16 = 160 lanes / channel

    # Load each input-channel slab once (one clean (8, 256) tile each).
    xc = [x_ref[ci] for ci in range(C_IN)]
    slabs = []
    for co in range(C_OUT):
        z = xc[0] * wc_ref[co, 0]
        for ci in range(1, C_IN):
            z = z + xc[ci] * wc_ref[co, ci]
        # BN folded into (w, b); Dropout layers are identity in eval mode.
        r = jnp.maximum(z + bc_ref[co], 0.0)        # (M_PAD, H*W)
        # H-direction 7-tap sum of AvgPool2d(7, stride=1). The W-direction taps
        # and the 1/49 are folded into wf offline. Static lane-shifted slices
        # lower to XLU work that hides under the weight DMA.
        hs = r[:, 0:hw_valid]
        for k in range(1, POOL):
            hs = hs + r[:, k * w_dim:k * w_dim + hw_valid]
        slabs.append(hs)                            # (M_PAD, 160)

    # (M_PAD, 640) activation built as a value -> straight into the MXU.
    act = jnp.concatenate(slabs, axis=-1).astype(jnp.bfloat16)
    o_ref[...] = (jnp.dot(act, wf_ref[...], preferred_element_type=jnp.float32)
                  + bf_ref[...])


def prepare_params(params, H, W):
    """One-time (offline) parameter folding."""
    Ho, Wo = H - POOL + 1, W - POOL + 1

    # Fold eval-mode BatchNorm into the 1x1 conv.
    scale = params["bn_gamma"] * jax.lax.rsqrt(params["bn_var"] + BN_EPS)
    w_conv = params["conv_w"] * scale[:, None]                # (4, 4)
    b_conv = params["bn_beta"] - params["bn_mean"] * scale    # (4,)

    # Fold ONLY the W-direction of AvgPool2d(7,1) (+ 1/49 + flatten) into the
    # FC weight; the H-direction sum stays in-kernel.  K = C*Ho*W = 640.
    w_ = jnp.arange(W)
    wo = jnp.arange(Wo)
    cov_w = ((w_[:, None] >= wo[None, :]) &
             (w_[:, None] <= wo[None, :] + POOL - 1)).astype(jnp.float32)  # (W, Wo)
    fc = params["fc_w_t"].reshape(C_OUT, Ho, Wo, N_OUT)       # (4, 10, 10, 1000)
    w_eff = jnp.einsum("wv,chvn->chwn", cov_w, fc) / float(POOL * POOL)
    w_eff = w_eff.reshape(C_OUT * Ho * W, N_OUT)              # (640, 1000)

    # Pad N 1000 -> 1024 (unmasked lane tiles); store the big weight in bf16.
    w_eff = jnp.pad(w_eff, ((0, 0), (0, N_PAD - N_OUT))).astype(jnp.bfloat16)
    b_eff = jnp.pad(params["fc_b"], (0, N_PAD - N_OUT))[None, :]  # (1, 1024) f32
    return {"w_conv": w_conv, "b_conv": b_conv, "w_eff": w_eff, "b_eff": b_eff}


def _default_n_split():
    # v7x has 2 TensorCores per chip -> split N so both get a weight half.
    # On 1-TC chips (v5e/v6e) extra grid steps only add per-step overhead.
    try:
        kind = jax.devices()[0].device_kind.lower()
    except Exception:
        return 1
    return 2 if "v7" in kind else 1


def inference_model_forward(x, prepped, *, n_split=None):
    B, C, H, W = x.shape
    Ho = H - POOL + 1
    K = C_OUT * Ho * W

    # Wrapper-side guards (VMEM writes inside the kernel are unchecked).
    assert C == C_IN, f"expected {C_IN} input channels, got {C}"
    assert B <= M_PAD, f"batch {B} > padded batch {M_PAD}"
    assert Ho >= 1 and W - POOL + 1 >= 1, "spatial dims too small for 7x7 pool"
    assert prepped["w_eff"].shape == (K, N_PAD), prepped["w_eff"].shape

    if n_split is None:
        n_split = _default_n_split()
    assert N_PAD % n_split == 0
    bn = N_PAD // n_split

    # (C, M_PAD, H*W): channel-major, batch padded to 8 sublanes (trivial 32 KB op).
    x3 = jnp.pad(jnp.transpose(x.reshape(B, C, H * W), (1, 0, 2)),
                 ((0, 0), (0, M_PAD - B), (0, 0)))

    kernel = functools.partial(fused_kernel, w_dim=W, h_out=Ho)

    weight_bytes = prepped["w_eff"].size * 2          # bf16
    cost = pl.CostEstimate(
        flops=2 * M_PAD * K * N_PAD,
        transcendentals=0,
        bytes_accessed=int(weight_bytes + x3.size * 4
                           + M_PAD * N_PAD * 4 + N_PAD * 4),
    )

    out = pl.pallas_call(
        kernel,
        out_shape=jax.ShapeDtypeStruct((M_PAD, N_PAD), jnp.float32),
        grid=(n_split,),
        in_specs=[
            pl.BlockSpec((C_IN, M_PAD, H * W), lambda j: (0, 0, 0)),
            pl.BlockSpec(memory_space=pltpu.MemorySpace.SMEM),
            pl.BlockSpec(memory_space=pltpu.MemorySpace.SMEM),
            # Default double-buffering already overlaps the weight-block DMA
            # with the (tiny) conv/pool compute of the other step.
            pl.BlockSpec((K, bn), lambda j: (0, j)),
            pl.BlockSpec((1, bn), lambda j: (0, j)),
        ],
        out_specs=pl.BlockSpec((M_PAD, bn), lambda j: (0, j)),
        compiler_params=pltpu.CompilerParams(
            dimension_semantics=("parallel",)),
        cost_estimate=cost,
    )(x3, prepped["w_conv"], prepped["b_conv"],
      prepped["w_eff"], prepped["b_eff"])

    # Slice off M/N padding (tiny wrapper-side op). Padded rows 2..7 hold
    # bias + relu(conv-bias)-propagated constants and are always discarded here.
    return out[:B, :N_OUT]


def reference_forward(x, params):
    """Pure-JAX f32 mirror of the PyTorch eval-mode forward."""
    y = jnp.einsum("oc,bchw->bohw", params["conv_w"], x,
                   precision=jax.lax.Precision.HIGHEST)
    y = (y - params["bn_mean"][None, :, None, None]) \
        * jax.lax.rsqrt(params["bn_var"] + BN_EPS)[None, :, None, None] \
        * params["bn_gamma"][None, :, None, None] \
        + params["bn_beta"][None, :, None, None]
    y = jnp.maximum(y, 0.0)
    y = jax.lax.reduce_window(y, 0.0, jax.lax.add,
                              (1, 1, POOL, POOL), (1, 1, 1, 1), "VALID")
    y = y / float(POOL * POOL)
    flat = y.reshape(y.shape[0], -1)
    return jnp.dot(flat, params["fc_w_t"],
                   precision=jax.lax.Precision.HIGHEST) + params["fc_b"]


def quantized_reference_forward(x, prepped, H, W):
    """Mirror of the kernel's exact math (f32 conv/relu/H-sum, bf16 folded
    weight + bf16 activation) to separate kernel-logic error from bf16
    quantization error."""
    B, C = x.shape[0], x.shape[1]
    Ho = H - POOL + 1
    xs = x.reshape(B, C, H * W)
    z = jnp.einsum("oc,bcs->bos", prepped["w_conv"], xs,
                   precision=jax.lax.Precision.HIGHEST)
    r = jnp.maximum(z + prepped["b_conv"][None, :, None], 0.0)
    r4 = r.reshape(B, C, H, W)
    hs = sum(r4[:, :, k:k + Ho, :] for k in range(POOL))      # (B, 4, 10, 16)
    a = hs.reshape(B, C_OUT * Ho * W).astype(jnp.bfloat16)     # (B, 640)
    out = jnp.dot(a, prepped["w_eff"], preferred_element_type=jnp.float32,
                  precision=jax.lax.Precision.HIGHEST) + prepped["b_eff"]
    return out[:, :N_OUT]


if __name__ == "__main__":
    # fc expects 400 = 4 * (H-6) * (W-6) features -> H = W = 16, C = 4.
    B, C, H, W = 2, 4, 16, 16
    N_IN = 400

    key = jax.random.PRNGKey(0)
    ks = jax.random.split(key, 8)

    x = jax.random.normal(ks[0], (B, C, H, W), dtype=jnp.float32)
    params = {
        "conv_w":  jax.random.normal(ks[1], (C_OUT, C_IN), jnp.float32) * 0.5,
        "bn_gamma": jax.random.uniform(ks[2], (C_OUT,), jnp.float32, 0.5, 1.5),
        "bn_beta":  jax.random.normal(ks[3], (C_OUT,), jnp.float32) * 0.1,
        "bn_mean":  jax.random.normal(ks[4], (C_OUT,), jnp.float32) * 0.1,
        "bn_var":   jax.random.uniform(ks[5], (C_OUT,), jnp.float32, 0.5, 1.5),
        # PyTorch Linear weight is (out, in); we store its transpose.
        "fc_w_t":  (jax.random.normal(ks[6], (N_OUT, N_IN), jnp.float32)
                    * (1.0 / jnp.sqrt(N_IN))).T,
        "fc_b":    jax.random.normal(ks[7], (N_OUT,), jnp.float32) * 0.01,
    }
    # TODO(synk): nn.Dropout(p=0.01) layers are identity in inference mode (no
    # RNG path emitted) and self.emb is unused in forward; both are omitted.

    prepped = prepare_params(params, H, W)

    out = jax.block_until_ready(inference_model_forward(x, prepped))
    ref = jax.block_until_ready(reference_forward(x, params))
    qref = jax.block_until_ready(quantized_reference_forward(x, prepped, H, W))

    assert out.shape == (B, N_OUT), out.shape
    # Tight check: kernel logic vs. an identical bf16-folded-weight reference.
    err_q = float(jnp.max(jnp.abs(out - qref)))
    assert err_q < 2e-3, f"kernel-logic error too large: {err_q}"
    # End-to-end check vs. the f32 PyTorch-mirror reference; slack covers the
    # bf16 storage of the folded weight / bf16 activation cast.
    err = float(jnp.max(jnp.abs(out - ref)))
    assert err < 2e-2, f"end-to-end error vs f32 reference too large: {err}"
    print("KERNEL_OK")
</pallas_src>

<mosaic_0001>
module attributes {stable_mosaic.version = 11 : i64} {
  func.func @fused_kernel(%arg0: i32, %arg1: memref<4x8x256xf32, #tpu.memory_space<vmem>>, %arg2: memref<4x4xf32, #tpu.memory_space<smem>>, %arg3: memref<4xf32, #tpu.memory_space<smem>>, %arg4: memref<640x1024xbf16, #tpu.memory_space<vmem>>, %arg5: memref<1x1024xf32, #tpu.memory_space<vmem>>, %arg6: memref<8x1024xf32, #tpu.memory_space<vmem>>) attributes {dimension_semantics = [#tpu.dimension_semantics<parallel>], iteration_bounds = array<i64: 1>, scalar_prefetch = 0 : i64, scratch_operands = 0 : i64, tpu.core_type = #tpu.core_type<tc>, window_params = [{pipeline_mode = #tpu.pipeline_mode<synchronous>, transform_indices = @transform_0, window_bounds = array<i64: 4, 8, 256>}, {transform_indices = @transform_1, window_bounds = array<i64: 4, 4>}, {transform_indices = @transform_2, window_bounds = array<i64: 4>}, {transform_indices = @transform_3, window_bounds = array<i64: 640, 1024>}, {transform_indices = @transform_4, window_bounds = array<i64: 1, 1024>}, {transform_indices = @transform_5, window_bounds = array<i64: 8, 1024>}]} {
    %c0 = arith.constant 0 : index
    %c0_0 = arith.constant 0 : index
    %c0_1 = arith.constant 0 : index
    %0 = vector.load %arg1[%c0, %c0_0, %c0_1] : memref<4x8x256xf32, #tpu.memory_space<vmem>>, vector<1x8x256xf32>
    %1 = vector.shape_cast %0 : vector<1x8x256xf32> to vector<8x256xf32>
    %c1 = arith.constant 1 : index
    %c0_2 = arith.constant 0 : index
    %c0_3 = arith.constant 0 : index
    %2 = vector.load %arg1[%c1, %c0_2, %c0_3] : memref<4x8x256xf32, #tpu.memory_space<vmem>>, vector<1x8x256xf32>
    %3 = vector.shape_cast %2 : vector<1x8x256xf32> to vector<8x256xf32>
    %c2 = arith.constant 2 : index
    %c0_4 = arith.constant 0 : index
    %c0_5 = arith.constant 0 : index
    %4 = vector.load %arg1[%c2, %c0_4, %c0_5] : memref<4x8x256xf32, #tpu.memory_space<vmem>>, vector<1x8x256xf32>
    %5 = vector.shape_cast %4 : vector<1x8x256xf32> to vector<8x256xf32>
    %c3 = arith.constant 3 : index
    %c0_6 = arith.constant 0 : index
    %c0_7 = arith.constant 0 : index
    %6 = vector.load %arg1[%c3, %c0_6, %c0_7] : memref<4x8x256xf32, #tpu.memory_space<vmem>>, vector<1x8x256xf32>
    %7 = vector.shape_cast %6 : vector<1x8x256xf32> to vector<8x256xf32>
    %c0_8 = arith.constant 0 : index
    %c0_9 = arith.constant 0 : index
    %8 = memref.load %arg2[%c0_8, %c0_9] : memref<4x4xf32, #tpu.memory_space<smem>>
    %9 = vector.broadcast %8 : f32 to vector<8x256xf32>
    %10 = arith.mulf %1, %9 : vector<8x256xf32>
    %c0_10 = arith.constant 0 : index
    %c1_11 = arith.constant 1 : index
    %11 = memref.load %arg2[%c0_10, %c1_11] : memref<4x4xf32, #tpu.memory_space<smem>>
    %12 = vector.broadcast %11 : f32 to vector<8x256xf32>
    %13 = arith.mulf %3, %12 : vector<8x256xf32>
    %14 = arith.addf %10, %13 : vector<8x256xf32>
    %c0_12 = arith.constant 0 : index
    %c2_13 = arith.constant 2 : index
    %15 = memref.load %arg2[%c0_12, %c2_13] : memref<4x4xf32, #tpu.memory_space<smem>>
    %16 = vector.broadcast %15 : f32 to vector<8x256xf32>
    %17 = arith.mulf %5, %16 : vector<8x256xf32>
    %18 = arith.addf %14, %17 : vector<8x256xf32>
    %c0_14 = arith.constant 0 : index
    %c3_15 = arith.constant 3 : index
    %19 = memref.load %arg2[%c0_14, %c3_15] : memref<4x4xf32, #tpu.memory_space<smem>>
    %20 = vector.broadcast %19 : f32 to vector<8x256xf32>
    %21 = arith.mulf %7, %20 : vector<8x256xf32>
    %22 = arith.addf %18, %21 : vector<8x256xf32>
    %c0_16 = arith.constant 0 : index
    %23 = memref.load %arg3[%c0_16] : memref<4xf32, #tpu.memory_space<smem>>
    %24 = vector.broadcast %23 : f32 to vector<8x256xf32>
    %25 = arith.addf %22, %24 : vector<8x256xf32>
    %cst = arith.constant 0.000000e+00 : f32
    %26 = vector.broadcast %cst : f32 to vector<8x256xf32>
    %27 = arith.maximumf %25, %26 : vector<8x256xf32>
    %28 = vector.extract_strided_slice %27 {offsets = [0, 0], sizes = [8, 160], strides = [1, 1]} : vector<8x256xf32> to vector<8x160xf32>
    %29 = vector.extract_strided_slice %27 {offsets = [0, 16], sizes = [8, 160], strides = [1, 1]} : vector<8x256xf32> to vector<8x160xf32>
    %30 = arith.addf %28, %29 : vector<8x160xf32>
    %31 = vector.extract_strided_slice %27 {offsets = [0, 32], sizes = [8, 160], strides = [1, 1]} : vector<8x256xf32> to vector<8x160xf32>
    %32 = arith.addf %30, %31 : vector<8x160xf32>
    %33 = vector.extract_strided_slice %27 {offsets = [0, 48], sizes = [8, 160], strides = [1, 1]} : vector<8x256xf32> to vector<8x160xf32>
    %34 = arith.addf %32, %33 : vector<8x160xf32>
    %35 = vector.extract_strided_slice %27 {offsets = [0, 64], sizes = [8, 160], strides = [1, 1]} : vector<8x256xf32> to vector<8x160xf32>
    %36 = arith.addf %34, %35 : vector<8x160xf32>
    %37 = vector.extract_strided_slice %27 {offsets = [0, 80], sizes = [8, 160], strides = [1, 1]} : vector<8x256xf32> to vector<8x160xf32>
    %38 = arith.addf %36, %37 : vector<8x160xf32>
    %39 = vector.extract_strided_slice %27 {offsets = [0, 96], sizes = [8, 160], strides = [1, 1]} : vector<8x256xf32> to vector<8x160xf32>
    %40 = arith.addf %38, %39 : vector<8x160xf32>
    %c1_17 = arith.constant 1 : index
    %c0_18 = arith.constant 0 : index
    %41 = memref.load %arg2[%c1_17, %c0_18] : memref<4x4xf32, #tpu.memory_space<smem>>
    %42 = vector.broadcast %41 : f32 to vector<8x256xf32>
    %43 = arith.mulf %1, %42 : vector<8x256xf32>
    %c1_19 = arith.constant 1 : index
    %c1_20 = arith.constant 1 : index
    %44 = memref.load %arg2[%c1_19, %c1_20] : memref<4x4xf32, #tpu.memory_space<smem>>
    %45 = vector.broadcast %44 : f32 to vector<8x256xf32>
    %46 = arith.mulf %3, %45 : vector<8x256xf32>
    %47 = arith.addf %43, %46 : vector<8x256xf32>
    %c1_21 = arith.constant 1 : index
    %c2_22 = arith.constant 2 : index
    %48 = memref.load %arg2[%c1_21, %c2_22] : memref<4x4xf32, #tpu.memory_space<smem>>
    %49 = vector.broadcast %48 : f32 to vector<8x256xf32>
    %50 = arith.mulf %5, %49 : vector<8x256xf32>
    %51 = arith.addf %47, %50 : vector<8x256xf32>
    %c1_23 = arith.constant 1 : index
    %c3_24 = arith.constant 3 : index
    %52 = memref.load %arg2[%c1_23, %c3_24] : memref<4x4xf32, #tpu.memory_space<smem>>
    %53 = vector.broadcast %52 : f32 to vector<8x256xf32>
    %54 = arith.mulf %7, %53 : vector<8x256xf32>
    %55 = arith.addf %51, %54 : vector<8x256xf32>
    %c1_25 = arith.constant 1 : index
    %56 = memref.load %arg3[%c1_25] : memref<4xf32, #tpu.memory_space<smem>>
    %57 = vector.broadcast %56 : f32 to vector<8x256xf32>
    %58 = arith.addf %55, %57 : vector<8x256xf32>
    %cst_26 = arith.constant 0.000000e+00 : f32
    %59 = vector.broadcast %cst_26 : f32 to vector<8x256xf32>
    %60 = arith.maximumf %58, %59 : vector<8x256xf32>
    %61 = vector.extract_strided_slice %60 {offsets = [0, 0], sizes = [8, 160], strides = [1, 1]} : vector<8x256xf32> to vector<8x160xf32>
    %62 = vector.extract_strided_slice %60 {offsets = [0, 16], sizes = [8, 160], strides = [1, 1]} : vector<8x256xf32> to vector<8x160xf32>
    %63 = arith.addf %61, %62 : vector<8x160xf32>
    %64 = vector.extract_strided_slice %60 {offsets = [0, 32], sizes = [8, 160], strides = [1, 1]} : vector<8x256xf32> to vector<8x160xf32>
    %65 = arith.addf %63, %64 : vector<8x160xf32>
    %66 = vector.extract_strided_slice %60 {offsets = [0, 48], sizes = [8, 160], strides = [1, 1]} : vector<8x256xf32> to vector<8x160xf32>
    %67 = arith.addf %65, %66 : vector<8x160xf32>
    %68 = vector.extract_strided_slice %60 {offsets = [0, 64], sizes = [8, 160], strides = [1, 1]} : vector<8x256xf32> to vector<8x160xf32>
    %69 = arith.addf %67, %68 : vector<8x160xf32>
    %70 = vector.extract_strided_slice %60 {offsets = [0, 80], sizes = [8, 160], strides = [1, 1]} : vector<8x256xf32> to vector<8x160xf32>
    %71 = arith.addf %69, %70 : vector<8x160xf32>
    %72 = vector.extract_strided_slice %60 {offsets = [0, 96], sizes = [8, 160], strides = [1, 1]} : vector<8x256xf32> to vector<8x160xf32>
    %73 = arith.addf %71, %72 : vector<8x160xf32>
    %c2_27 = arith.constant 2 : index
    %c0_28 = arith.constant 0 : index
    %74 = memref.load %arg2[%c2_27, %c0_28] : memref<4x4xf32, #tpu.memory_space<smem>>
    %75 = vector.broadcast %74 : f32 to vector<8x256xf32>
    %76 = arith.mulf %1, %75 : vector<8x256xf32>
    %c2_29 = arith.constant 2 : index
    %c1_30 = arith.constant 1 : index
    %77 = memref.load %arg2[%c2_29, %c1_30] : memref<4x4xf32, #tpu.memory_space<smem>>
    %78 = vector.broadcast %77 : f32 to vector<8x256xf32>
    %79 = arith.mulf %3, %78 : vector<8x256xf32>
    %80 = arith.addf %76, %79 : vector<8x256xf32>
    %c2_31 = arith.constant 2 : index
    %c2_32 = arith.constant 2 : index
    %81 = memref.load %arg2[%c2_31, %c2_32] : memref<4x4xf32, #tpu.memory_space<smem>>
    %82 = vector.broadcast %81 : f32 to vector<8x256xf32>
    %83 = arith.mulf %5, %82 : vector<8x256xf32>
    %84 = arith.addf %80, %83 : vector<8x256xf32>
    %c2_33 = arith.constant 2 : index
    %c3_34 = arith.constant 3 : index
    %85 = memref.load %arg2[%c2_33, %c3_34] : memref<4x4xf32, #tpu.memory_space<smem>>
    %86 = vector.broadcast %85 : f32 to vector<8x256xf32>
    %87 = arith.mulf %7, %86 : vector<8x256xf32>
    %88 = arith.addf %84, %87 : vector<8x256xf32>
    %c2_35 = arith.constant 2 : index
    %89 = memref.load %arg3[%c2_35] : memref<4xf32, #tpu.memory_space<smem>>
    %90 = vector.broadcast %89 : f32 to vector<8x256xf32>
    %91 = arith.addf %88, %90 : vector<8x256xf32>
    %cst_36 = arith.constant 0.000000e+00 : f32
    %92 = vector.broadcast %cst_36 : f32 to vector<8x256xf32>
    %93 = arith.maximumf %91, %92 : vector<8x256xf32>
    %94 = vector.extract_strided_slice %93 {offsets = [0, 0], sizes = [8, 160], strides = [1, 1]} : vector<8x256xf32> to vector<8x160xf32>
    %95 = vector.extract_strided_slice %93 {offsets = [0, 16], sizes = [8, 160], strides = [1, 1]} : vector<8x256xf32> to vector<8x160xf32>
    %96 = arith.addf %94, %95 : vector<8x160xf32>
    %97 = vector.extract_strided_slice %93 {offsets = [0, 32], sizes = [8, 160], strides = [1, 1]} : vector<8x256xf32> to vector<8x160xf32>
    %98 = arith.addf %96, %97 : vector<8x160xf32>
    %99 = vector.extract_strided_slice %93 {offsets = [0, 48], sizes = [8, 160], strides = [1, 1]} : vector<8x256xf32> to vector<8x160xf32>
    %100 = arith.addf %98, %99 : vector<8x160xf32>
    %101 = vector.extract_strided_slice %93 {offsets = [0, 64], sizes = [8, 160], strides = [1, 1]} : vector<8x256xf32> to vector<8x160xf32>
    %102 = arith.addf %100, %101 : vector<8x160xf32>
    %103 = vector.extract_strided_slice %93 {offsets = [0, 80], sizes = [8, 160], strides = [1, 1]} : vector<8x256xf32> to vector<8x160xf32>
    %104 = arith.addf %102, %103 : vector<8x160xf32>
    %105 = vector.extract_strided_slice %93 {offsets = [0, 96], sizes = [8, 160], strides = [1, 1]} : vector<8x256xf32> to vector<8x160xf32>
    %106 = arith.addf %104, %105 : vector<8x160xf32>
    %c3_37 = arith.constant 3 : index
    %c0_38 = arith.constant 0 : index
    %107 = memref.load %arg2[%c3_37, %c0_38] : memref<4x4xf32, #tpu.memory_space<smem>>
    %108 = vector.broadcast %107 : f32 to vector<8x256xf32>
    %109 = arith.mulf %1, %108 : vector<8x256xf32>
    %c3_39 = arith.constant 3 : index
    %c1_40 = arith.constant 1 : index
    %110 = memref.load %arg2[%c3_39, %c1_40] : memref<4x4xf32, #tpu.memory_space<smem>>
    %111 = vector.broadcast %110 : f32 to vector<8x256xf32>
    %112 = arith.mulf %3, %111 : vector<8x256xf32>
    %113 = arith.addf %109, %112 : vector<8x256xf32>
    %c3_41 = arith.constant 3 : index
    %c2_42 = arith.constant 2 : index
    %114 = memref.load %arg2[%c3_41, %c2_42] : memref<4x4xf32, #tpu.memory_space<smem>>
    %115 = vector.broadcast %114 : f32 to vector<8x256xf32>
    %116 = arith.mulf %5, %115 : vector<8x256xf32>
    %117 = arith.addf %113, %116 : vector<8x256xf32>
    %c3_43 = arith.constant 3 : index
    %c3_44 = arith.constant 3 : index
    %118 = memref.load %arg2[%c3_43, %c3_44] : memref<4x4xf32, #tpu.memory_space<smem>>
    %119 = vector.broadcast %118 : f32 to vector<8x256xf32>
    %120 = arith.mulf %7, %119 : vector<8x256xf32>
    %121 = arith.addf %117, %120 : vector<8x256xf32>
    %c3_45 = arith.constant 3 : index
    %122 = memref.load %arg3[%c3_45] : memref<4xf32, #tpu.memory_space<smem>>
    %123 = vector.broadcast %122 : f32 to vector<8x256xf32>
    %124 = arith.addf %121, %123 : vector<8x256xf32>
    %cst_46 = arith.constant 0.000000e+00 : f32
    %125 = vector.broadcast %cst_46 : f32 to vector<8x256xf32>
    %126 = arith.maximumf %124, %125 : vector<8x256xf32>
    %127 = vector.extract_strided_slice %126 {offsets = [0, 0], sizes = [8, 160], strides = [1, 1]} : vector<8x256xf32> to vector<8x160xf32>
    %128 = vector.extract_strided_slice %126 {offsets = [0, 16], sizes = [8, 160], strides = [1, 1]} : vector<8x256xf32> to vector<8x160xf32>
    %129 = arith.addf %127, %128 : vector<8x160xf32>
    %130 = vector.extract_strided_slice %126 {offsets = [0, 32], sizes = [8, 160], strides = [1, 1]} : vector<8x256xf32> to vector<8x160xf32>
    %131 = arith.addf %129, %130 : vector<8x160xf32>
    %132 = vector.extract_strided_slice %126 {offsets = [0, 48], sizes = [8, 160], strides = [1, 1]} : vector<8x256xf32> to vector<8x160xf32>
    %133 = arith.addf %131, %132 : vector<8x160xf32>
    %134 = vector.extract_strided_slice %126 {offsets = [0, 64], sizes = [8, 160], strides = [1, 1]} : vector<8x256xf32> to vector<8x160xf32>
    %135 = arith.addf %133, %134 : vector<8x160xf32>
    %136 = vector.extract_strided_slice %126 {offsets = [0, 80], sizes = [8, 160], strides = [1, 1]} : vector<8x256xf32> to vector<8x160xf32>
    %137 = arith.addf %135, %136 : vector<8x160xf32>
    %138 = vector.extract_strided_slice %126 {offsets = [0, 96], sizes = [8, 160], strides = [1, 1]} : vector<8x256xf32> to vector<8x160xf32>
    %139 = arith.addf %137, %138 : vector<8x160xf32>
    %140 = tpu.concatenate %40, %73, %106, %139 in 1 : vector<8x160xf32>, vector<8x160xf32>, vector<8x160xf32>, vector<8x160xf32> -> vector<8x640xf32>
    %141 = arith.truncf %140 : vector<8x640xf32> to vector<8x640xbf16>
    %c0_47 = arith.constant 0 : index
    %c0_48 = arith.constant 0 : index
    %142 = vector.load %arg4[%c0_47, %c0_48] : memref<640x1024xbf16, #tpu.memory_space<vmem>>, vector<640x1024xbf16>
    %cst_49 = arith.constant dense<0.000000e+00> : vector<8x1024xf32>
    %143 = tpu.matmul %141, %142, %cst_49 {dimension_numbers = #tpu.dot_dimension_numbers<[1], [0], [0], [1], [0, 0, 1, 1], [], []>} : vector<8x640xbf16>, vector<640x1024xbf16>, vector<8x1024xf32> -> vector<8x1024xf32>
    %c0_50 = arith.constant 0 : index
    %c0_51 = arith.constant 0 : index
    %144 = vector.load %arg5[%c0_50, %c0_51] : memref<1x1024xf32, #tpu.memory_space<vmem>>, vector<1x1024xf32>
    %145 = vector.broadcast %144 : vector<1x1024xf32> to vector<8x1024xf32>
    %146 = arith.addf %143, %145 : vector<8x1024xf32>
    %c0_52 = arith.constant 0 : index
    %c0_53 = arith.constant 0 : index
    %147 = vector.load %arg6[%c0_52, %c0_53] : memref<8x1024xf32, #tpu.memory_space<vmem>>, vector<8x1024xf32>
    tpu.vector_store %arg6[%c0_52, %c0_53], %146 {strides = array<i32>} : memref<8x1024xf32, #tpu.memory_space<vmem>>, vector<8x1024xf32>,
    return
  }
  func.func @transform_0(%arg0: i32) -> (i32, i32, i32) {
    %c0_i32 = arith.constant 0 : i32
    %c0_i32_0 = arith.constant 0 : i32
    %c0_i32_1 = arith.constant 0 : i32
    %c0_i32_2 = arith.constant 0 : i32
    return %c0_i32, %c0_i32_0, %c0_i32_1 : i32, i32, i32
  }
  func.func @transform_1(%arg0: i32) -> (i32, i32) {
    %c0_i32 = arith.constant 0 : i32
    %c0_i32_0 = arith.constant 0 : i32
    %c0_i32_1 = arith.constant 0 : i32
    return %c0_i32, %c0_i32_0 : i32, i32
  }
  func.func @transform_2(%arg0: i32) -> i32 {
    %c0_i32 = arith.constant 0 : i32
    %c0_i32_0 = arith.constant 0 : i32
    return %c0_i32 : i32
  }
  func.func @transform_3(%arg0: i32) -> (i32, i32) {
    %c0_i32 = arith.constant 0 : i32
    %c0_i32_0 = arith.constant 0 : i32
    return %c0_i32, %arg0 : i32, i32
  }
  func.func @transform_4(%arg0: i32) -> (i32, i32) {
    %c0_i32 = arith.constant 0 : i32
    %c0_i32_0 = arith.constant 0 : i32
    return %c0_i32, %arg0 : i32, i32
  }
  func.func @transform_5(%arg0: i32) -> (i32, i32) {
    %c0_i32 = arith.constant 0 : i32
    %c0_i32_0 = arith.constant 0 : i32
    return %c0_i32, %arg0 : i32, i32
  }
}

</mosaic_0001>

<llo_original>
// kernel: tpu_custom_call.1
$region0: #{tpu_custom_call.1}
  #allocation0 [shape = 'u32[]', space=smem, size = 0x4, offset = 0x4, fixed_abs, tag = 'smem constant byte address 0x4 - core index']
  #allocation1 [shape = 'u32[144,128]{1,0:T(1,128)}', space=vmem, size = 0x12000, scoped, tag = 'internal scratch']
  %s0 = inlined_call_operand.hbm [shape: f32[4,8,256], index: 0, kind: input, shape index: {}]
  %s1 = inlined_call_operand.hbm [shape: f32[4,4], index: 1, kind: input, shape index: {}]
  %s2 = inlined_call_operand.hbm [shape: f32[4], index: 2, kind: input, shape index: {}]
  %s3 = inlined_call_operand.hbm [shape: bf16[640,1024], index: 3, kind: input, shape index: {}]
  %s4 = inlined_call_operand.hbm [shape: f32[1,1024], index: 4, kind: input, shape index: {}]
  %s5 = inlined_call_operand.hbm [shape: f32[8,1024], index: 5, kind: output, shape index: {}]
  %s6 = sld [smem:[#allocation0]]
  $region50: #{tpu_custom_call.1} parent=0
    _
  %s8 = ssub.s32 1, %s6
  %s9 = scalar_select 0, %s8, %s6
  $region1: #{tpu_custom_call.1} parent=0
    #allocation2 [shape = 'u8[32768]{0}', space=vmem, size = 0x8000, scoped, tag = 'input window, operand 0, single buffered']
    #allocation3 [shape = 's32[1]{0}', space=sflag, size = 0x4, scoped, tag = 'scoped memory for tpu_custom_call.1']
    #allocation4 [shape = 's32[1]{0}', space=sflag, size = 0x4, scoped, tag = 'scoped memory for tpu_custom_call.1']
    #allocation5 [shape = 's32[1]{0}', space=sflag, size = 0x4, scoped, tag = 'scoped memory for tpu_custom_call.1']
    #allocation6 [shape = 'u8[2048]{0}', space=smem, size = 0x800, scoped, tag = 'input window, operand 1, single buffered']
    #allocation7 [shape = 'u8[512]{0}', space=smem, size = 0x200, scoped, tag = 'input window, operand 2, single buffered']
    #allocation8 [shape = 's32[1]{0}', space=sflag, size = 0x4, scoped, tag = 'scoped memory for tpu_custom_call.1']
    #allocation9 [shape = 'u8[1310720]{0}', space=vmem, size = 0x140000, scoped, tag = 'input window, operand 3, single buffered']
    #allocation10 [shape = 's32[1]{0}', space=sflag, size = 0x4, scoped, tag = 'scoped memory for tpu_custom_call.1']
    #allocation11 [shape = 'u8[4096]{0}', space=vmem, size = 0x1000, scoped, tag = 'input window, operand 4, single buffered']
    #allocation12 [shape = 'u8[32768]{0}', space=vmem, size = 0x8000, scoped, tag = 'output window, operand 0, single buffered']
    %10 = vsyncpa [#allocation3], 0
    %11 = vsyncpa [#allocation5], 0
    %12 = vsyncpa [#allocation8], 0
    %13 = vsyncpa [#allocation10], 0
    %14 = vsyncpa [#allocation4], 0
    // Predicated region
    $region2: #{tpu_custom_call.1} parent=1 // pred_check
      _
    $region3: #{tpu_custom_call.1} parent=1 // pred_check_branch
      %16 = sbr.rel (0) target = $region5
    $region4: #{tpu_custom_call.1} parent=1 // pred_region
      %s18 = ssub.s32 1024, 1024
      %19 = vsyncadd [#allocation3], %s18
      %s20 = sshll.u32 [#allocation2], 4
      %s21 = int_to_ptr.vmem [resolvable:$true] %s20
      %26 = dma.hbm_to_vmem [thread:$0]  %s0, 1024, %s21, [#allocation3], 256, 256, 16
    $region5: #{tpu_custom_call.1} parent=1 // pred_fallthru
      _
    // Predicated region
    $region6: #{tpu_custom_call.1} parent=1 // pred_check
      _
    $region7: #{tpu_custom_call.1} parent=1 // pred_check_branch
      %28 = sbr.rel (0) target = $region9
    $region8: #{tpu_custom_call.1} parent=1 // pred_region
      %s30 = ssub.s32 64, 64
      %31 = vsyncadd [#allocation5], %s30
      %34 = dma.hbm_to_smem %s1, 64, [#allocation6], [#allocation5]
    $region9: #{tpu_custom_call.1} parent=1 // pred_fallthru
      _
    // Predicated region
    $region10: #{tpu_custom_call.1} parent=1 // pred_check
      _
    $region11: #{tpu_custom_call.1} parent=1 // pred_check_branch
      %36 = sbr.rel (0) target = $region13
    $region12: #{tpu_custom_call.1} parent=1 // pred_region
      %s38 = ssub.s32 16, 16
      %39 = vsyncadd [#allocation8], %s38
      %42 = dma.hbm_to_smem %s2, 16, [#allocation7], [#allocation8]
    $region13: #{tpu_custom_call.1} parent=1 // pred_fallthru
      _
    // Predicated region
    $region14: #{tpu_custom_call.1} parent=1 // pred_check
      _
    $region15: #{tpu_custom_call.1} parent=1 // pred_check_branch
      %44 = sbr.rel (0) target = $region17
    $region16: #{tpu_custom_call.1} parent=1 // pred_region
      %s46 = ssub.s32 40960, 40960
      %47 = vsyncadd [#allocation10], %s46
      %s48 = sshll.u32 [#allocation9], 4
      %s49 = int_to_ptr.vmem [resolvable:$true] %s48
      %54 = dma.hbm_to_vmem [thread:$0]  %s3, 40960, %s49, [#allocation10], 512, 512, 32
    $region17: #{tpu_custom_call.1} parent=1 // pred_fallthru
      _
    // Predicated region
    $region18: #{tpu_custom_call.1} parent=1 // pred_check
      _
    $region19: #{tpu_custom_call.1} parent=1 // pred_check_branch
      %56 = sbr.rel (0) target = $region21
    $region20: #{tpu_custom_call.1} parent=1 // pred_region
      %s58 = ssub.s32 128, 128
      %59 = vsyncadd [#allocation10], %s58
      %s61 = sshll.u32 [#allocation11], 4
      %s62 = int_to_ptr.vmem [resolvable:$true] %s61
      %64 = dma.hbm_to_vmem [thread:$0]  %s4, 128, %s62, [#allocation10]
    $region21: #{tpu_custom_call.1} parent=1 // pred_fallthru
      _
    // Predicated region
    $region22: #{tpu_custom_call.1} parent=1 // pred_check
      _
    $region23: #{tpu_custom_call.1} parent=1 // pred_check_branch
      %66 = sbr.rel (0) target = $region25
    $region24: #{tpu_custom_call.1} parent=1 // pred_region
      %67 = dma.done [#allocation3], 1024
    $region25: #{tpu_custom_call.1} parent=1 // pred_fallthru
      _
    // Predicated region
    $region26: #{tpu_custom_call.1} parent=1 // pred_check
      _
    $region27: #{tpu_custom_call.1} parent=1 // pred_check_branch
      %69 = sbr.rel (0) target = $region29
    $region28: #{tpu_custom_call.1} parent=1 // pred_region
      %70 = dma.done [#allocation5], 64
    $region29: #{tpu_custom_call.1} parent=1 // pred_fallthru
      _
    // Predicated region
    $region30: #{tpu_custom_call.1} parent=1 // pred_check
      _
    $region31: #{tpu_custom_call.1} parent=1 // pred_check_branch
      %72 = sbr.rel (0) target = $region33
    $region32: #{tpu_custom_call.1} parent=1 // pred_region
      %73 = dma.done [#allocation8], 16
    $region33: #{tpu_custom_call.1} parent=1 // pred_fallthru
      _
    // Predicated region
    $region34: #{tpu_custom_call.1} parent=1 // pred_check
      _
    $region35: #{tpu_custom_call.1} parent=1 // pred_check_branch
      %75 = sbr.rel (0) target = $region37
    $region36: #{tpu_custom_call.1} parent=1 // pred_region
      %76 = dma.done [#allocation10], 40960
    $region37: #{tpu_custom_call.1} parent=1 // pred_fallthru
      _
    // Predicated region
    $region38: #{tpu_custom_call.1} parent=1 // pred_check
      _
    $region39: #{tpu_custom_call.1} parent=1 // pred_check_branch
      %78 = sbr.rel (0) target = $region41
    $region40: #{tpu_custom_call.1} parent=1 // pred_region
      %79 = dma.done [#allocation10], 128
    $region41: #{tpu_custom_call.1} parent=1 // pred_fallthru
      _
    %80 = sfence
    %v82 = vld [vmem:[#allocation2] sm:$0xff]
    %v83 = vld [vmem:[#allocation2 + $0x8] sm:$0xff]
    %s84 = scalar_lea.vmem [#allocation2], 16
    %v85 = vld [vmem:[%s84] sm:$0xff]
    %v86 = vld [vmem:[%s84 + $0x8] sm:$0xff]
    %s87 = scalar_lea.vmem [#allocation2], 32
    %v88 = vld [vmem:[%s87] sm:$0xff]
    %v89 = vld [vmem:[%s87 + $0x8] sm:$0xff]
    %s90 = scalar_lea.vmem [#allocation2], 48
    %v91 = vld [vmem:[%s90] sm:$0xff]
    %v92 = vld [vmem:[%s90 + $0x8] sm:$0xff]
    %s93 = sld [smem:[#allocation6]]
    %v94 = vstv %s93
    %v95 = vmul.f32 %v82, %v94
    %v96 = vmul.f32 %v83, %v94
    %s97 = sld [smem:[#allocation6 + $0x1]]
    %v98 = vstv %s97
    %v99 = vmul.f32 %v85, %v98
    %v100 = vmul.f32 %v86, %v98
    %v101 = vadd.f32 %v95, %v99
    %v102 = vadd.f32 %v96, %v100
    %s103 = sld [smem:[#allocation6 + $0x2]]
    %v104 = vstv %s103
    %v105 = vmul.f32 %v88, %v104
    %v106 = vmul.f32 %v89, %v104
    %v107 = vadd.f32 %v101, %v105
    %v108 = vadd.f32 %v102, %v106
    %s109 = sld [smem:[#allocation6 + $0x3]]
    %v110 = vstv %s109
    %v111 = vmul.f32 %v91, %v110
    %v112 = vmul.f32 %v92, %v110
    %v113 = vadd.f32 %v107, %v111
    %v114 = vadd.f32 %v108, %v112
    %s115 = sld [smem:[#allocation7]]
    %v116 = vstv %s115
    %v117 = vadd.f32 %v113, %v116
    %v118 = vadd.f32 %v114, %v116
    %v119 = vmax.f32 %v117, 0.0
    %v120 = vmax.f32 %v118, 0.0
    %123 = vrot.lane.b32.xlu0 %v119, 112
    %v124 = vpop.permute.xlu0 %123
    %125 = vrot.lane.b32.xlu0 %v120, 112
    %v126 = vpop.permute.xlu0 %125
    %vm127 = vcmask 916480
    %v128 = vsel %vm127, %v124, %v126
    %v131 = vadd.f32 %v119, %v128
    %v132 = vadd.f32 %v120, %v126
    %133 = vrot.lane.b32.xlu0 %v119, 96
    %v134 = vpop.permute.xlu0 %133
    %135 = vrot.lane.b32.xlu0 %v120, 96
    %v136 = vpop.permute.xlu0 %135
    %vm137 = vcmask 785408
    %v138 = vsel %vm137, %v134, %v136
    %v141 = vadd.f32 %v131, %v138
    %v142 = vadd.f32 %v132, %v136
    %143 = vrot.lane.b32.xlu0 %v119, 80
    %v144 = vpop.permute.xlu0 %143
    %145 = vrot.lane.b32.xlu0 %v120, 80
    %v146 = vpop.permute.xlu0 %145
    %vm147 = vcmask 654336
    %v148 = vsel %vm147, %v144, %v146
    %v151 = vadd.f32 %v141, %v148
    %v152 = vadd.f32 %v142, %v146
    %153 = vrot.lane.b32.xlu0 %v119, 64
    %v154 = vpop.permute.xlu0 %153
    %155 = vrot.lane.b32.xlu0 %v120, 64
    %v156 = vpop.permute.xlu0 %155
    %vm157 = vcmask 523264
    %v158 = vsel %vm157, %v154, %v156
    %v161 = vadd.f32 %v151, %v158
    %v162 = vadd.f32 %v152, %v156
    %163 = vrot.lane.b32.xlu0 %v119, 48
    %v164 = vpop.permute.xlu0 %163
    %165 = vrot.lane.b32.xlu0 %v120, 48
    %v166 = vpop.permute.xlu0 %165
    %vm167 = vcmask 392192
    %v168 = vsel %vm167, %v164, %v166
    %v171 = vadd.f32 %v161, %v168
    %v172 = vadd.f32 %v162, %v166
    %173 = vrot.lane.b32.xlu0 %v119, 32
    %v174 = vpop.permute.xlu0 %173
    %175 = vrot.lane.b32.xlu0 %v120, 32
    %v176 = vpop.permute.xlu0 %175
    %vm177 = vcmask 261120
    %v178 = vsel %vm177, %v174, %v176
    %v181 = vadd.f32 %v171, %v178
    %v182 = vadd.f32 %v172, %v176
    %s183 = sld [smem:[#allocation6 + $0x80]]
    %v184 = vstv %s183
    %v185 = vmul.f32 %v82, %v184
    %v186 = vmul.f32 %v83, %v184
    %s187 = sld [smem:[#allocation6 + $0x81]]
    %v188 = vstv %s187
    %v189 = vmul.f32 %v85, %v188
    %v190 = vmul.f32 %v86, %v188
    %v191 = vadd.f32 %v185, %v189
    %v192 = vadd.f32 %v186, %v190
    %s193 = sld [smem:[#allocation6 + $0x82]]
    %v194 = vstv %s193
    %v195 = vmul.f32 %v88, %v194
    %v196 = vmul.f32 %v89, %v194
    %v197 = vadd.f32 %v191, %v195
    %v198 = vadd.f32 %v192, %v196
    %s199 = sld [smem:[#allocation6 + $0x83]]
    %v200 = vstv %s199
    %v201 = vmul.f32 %v91, %v200
    %v202 = vmul.f32 %v92, %v200
    %v203 = vadd.f32 %v197, %v201
    %v204 = vadd.f32 %v198, %v202
    %s205 = sld [smem:[#allocation7 + $0x1]]
    %v206 = vstv %s205
    %v207 = vadd.f32 %v203, %v206
    %v208 = vadd.f32 %v204, %v206
    %v209 = vmax.f32 %v207, 0.0
    %v210 = vmax.f32 %v208, 0.0
    %213 = vrot.lane.b32.xlu0 %v209, 112
    %v214 = vpop.permute.xlu0 %213
    %215 = vrot.lane.b32.xlu0 %v210, 112
    %v216 = vpop.permute.xlu0 %215
    %v217 = vsel %vm127, %v214, %v216
    %v220 = vadd.f32 %v209, %v217
    %v221 = vadd.f32 %v210, %v216
    %222 = vrot.lane.b32.xlu0 %v209, 96
    %v223 = vpop.permute.xlu0 %222
    %224 = vrot.lane.b32.xlu0 %v210, 96
    %v225 = vpop.permute.xlu0 %224
    %v226 = vsel %vm137, %v223, %v225
    %v229 = vadd.f32 %v220, %v226
    %v230 = vadd.f32 %v221, %v225
    %231 = vrot.lane.b32.xlu0 %v209, 80
    %v232 = vpop.permute.xlu0 %231
    %233 = vrot.lane.b32.xlu0 %v210, 80
    %v234 = vpop.permute.xlu0 %233
    %v235 = vsel %vm147, %v232, %v234
    %v238 = vadd.f32 %v229, %v235
    %v239 = vadd.f32 %v230, %v234
    %240 = vrot.lane.b32.xlu0 %v209, 64
    %v241 = vpop.permute.xlu0 %240
    %242 = vrot.lane.b32.xlu0 %v210, 64
    %v243 = vpop.permute.xlu0 %242
    %v244 = vsel %vm157, %v241, %v243
    %v247 = vadd.f32 %v238, %v244
    %v248 = vadd.f32 %v239, %v243
    %249 = vrot.lane.b32.xlu0 %v209, 48
    %v250 = vpop.permute.xlu0 %249
    %251 = vrot.lane.b32.xlu0 %v210, 48
    %v252 = vpop.permute.xlu0 %251
    %v253 = vsel %vm167, %v250, %v252
    %v256 = vadd.f32 %v247, %v253
    %v257 = vadd.f32 %v248, %v252
    %258 = vrot.lane.b32.xlu0 %v209, 32
    %v259 = vpop.permute.xlu0 %258
    %260 = vrot.lane.b32.xlu0 %v210, 32
    %v261 = vpop.permute.xlu0 %260
    %v262 = vsel %vm177, %v259, %v261
    %v265 = vadd.f32 %v256, %v262
    %v266 = vadd.f32 %v257, %v261
    %s267 = sld [smem:[#allocation6 + $0x100]]
    %v268 = vstv %s267
    %v269 = vmul.f32 %v82, %v268
    %v270 = vmul.f32 %v83, %v268
    %s271 = sld [smem:[#allocation6 + $0x101]]
    %v272 = vstv %s271
    %v273 = vmul.f32 %v85, %v272
    %v274 = vmul.f32 %v86, %v272
    %v275 = vadd.f32 %v269, %v273
    %v276 = vadd.f32 %v270, %v274
    %s277 = sld [smem:[#allocation6 + $0x102]]
    %v278 = vstv %s277
    %v279 = vmul.f32 %v88, %v278
    %v280 = vmul.f32 %v89, %v278
    %v281 = vadd.f32 %v275, %v279
    %v282 = vadd.f32 %v276, %v280
    %s283 = sld [smem:[#allocation6 + $0x103]]
    %v284 = vstv %s283
    %v285 = vmul.f32 %v91, %v284
    %v286 = vmul.f32 %v92, %v284
    %v287 = vadd.f32 %v281, %v285
    %v288 = vadd.f32 %v282, %v286
    %s289 = sld [smem:[#allocation7 + $0x2]]
    %v290 = vstv %s289
    %v291 = vadd.f32 %v287, %v290
    %v292 = vadd.f32 %v288, %v290
    %v293 = vmax.f32 %v291, 0.0
    %v294 = vmax.f32 %v292, 0.0
    %297 = vrot.lane.b32.xlu0 %v293, 112
    %v298 = vpop.permute.xlu0 %297
    %299 = vrot.lane.b32.xlu0 %v294, 112
    %v300 = vpop.permute.xlu0 %299
    %v301 = vsel %vm127, %v298, %v300
    %v304 = vadd.f32 %v293, %v301
    %v305 = vadd.f32 %v294, %v300
    %306 = vrot.lane.b32.xlu0 %v293, 96
    %v307 = vpop.permute.xlu0 %306
    %308 = vrot.lane.b32.xlu0 %v294, 96
    %v309 = vpop.permute.xlu0 %308
    %v310 = vsel %vm137, %v307, %v309
    %v313 = vadd.f32 %v304, %v310
    %v314 = vadd.f32 %v305, %v309
    %315 = vrot.lane.b32.xlu0 %v293, 80
    %v316 = vpop.permute.xlu0 %315
    %317 = vrot.lane.b32.xlu0 %v294, 80
    %v318 = vpop.permute.xlu0 %317
    %v319 = vsel %vm147, %v316, %v318
    %v322 = vadd.f32 %v313, %v319
    %v323 = vadd.f32 %v314, %v318
    %324 = vrot.lane.b32.xlu0 %v293, 64
    %v325 = vpop.permute.xlu0 %324
    %326 = vrot.lane.b32.xlu0 %v294, 64
    %v327 = vpop.permute.xlu0 %326
    %v328 = vsel %vm157, %v325, %v327
    %v331 = vadd.f32 %v322, %v328
    %v332 = vadd.f32 %v323, %v327
    %333 = vrot.lane.b32.xlu0 %v293, 48
    %v334 = vpop.permute.xlu0 %333
    %335 = vrot.lane.b32.xlu0 %v294, 48
    %v336 = vpop.permute.xlu0 %335
    %v337 = vsel %vm167, %v334, %v336
    %v340 = vadd.f32 %v331, %v337
    %v341 = vadd.f32 %v332, %v336
    %342 = vrot.lane.b32.xlu0 %v293, 32
    %v343 = vpop.permute.xlu0 %342
    %344 = vrot.lane.b32.xlu0 %v294, 32
    %v345 = vpop.permute.xlu0 %344
    %v346 = vsel %vm177, %v343, %v345
    %v349 = vadd.f32 %v340, %v346
    %v350 = vadd.f32 %v341, %v345
    %s351 = sld [smem:[#allocation6 + $0x180]]
    %v352 = vstv %s351
    %v353 = vmul.f32 %v82, %v352
    %v354 = vmul.f32 %v83, %v352
    %s355 = sld [smem:[#allocation6 + $0x181]]
    %v356 = vstv %s355
    %v357 = vmul.f32 %v85, %v356
    %v358 = vmul.f32 %v86, %v356
    %v359 = vadd.f32 %v353, %v357
    %v360 = vadd.f32 %v354, %v358
    %s361 = sld [smem:[#allocation6 + $0x182]]
    %v362 = vstv %s361
    %v363 = vmul.f32 %v88, %v362
    %v364 = vmul.f32 %v89, %v362
    %v365 = vadd.f32 %v359, %v363
    %v366 = vadd.f32 %v360, %v364
    %s367 = sld [smem:[#allocation6 + $0x183]]
    %v368 = vstv %s367
    %v369 = vmul.f32 %v91, %v368
    %v370 = vmul.f32 %v92, %v368
    %v371 = vadd.f32 %v365, %v369
    %v372 = vadd.f32 %v366, %v370
    %s373 = sld [smem:[#allocation7 + $0x3]]
    %v374 = vstv %s373
    %v375 = vadd.f32 %v371, %v374
    %v376 = vadd.f32 %v372, %v374
    %v377 = vmax.f32 %v375, 0.0
    %v378 = vmax.f32 %v376, 0.0
    %381 = vrot.lane.b32.xlu0 %v377, 112
    %v382 = vpop.permute.xlu0 %381
    %383 = vrot.lane.b32.xlu0 %v378, 112
    %v384 = vpop.permute.xlu0 %383
    %v385 = vsel %vm127, %v382, %v384
    %v388 = vadd.f32 %v377, %v385
    %v389 = vadd.f32 %v378, %v384
    %390 = vrot.lane.b32.xlu0 %v377, 96
    %v391 = vpop.permute.xlu0 %390
    %392 = vrot.lane.b32.xlu0 %v378, 96
    %v393 = vpop.permute.xlu0 %392
    %v394 = vsel %vm137, %v391, %v393
    %v397 = vadd.f32 %v388, %v394
    %v398 = vadd.f32 %v389, %v393
    %399 = vrot.lane.b32.xlu0 %v377, 80
    %v400 = vpop.permute.xlu0 %399
    %401 = vrot.lane.b32.xlu0 %v378, 80
    %v402 = vpop.permute.xlu0 %401
    %v403 = vsel %vm147, %v400, %v402
    %v406 = vadd.f32 %v397, %v403
    %v407 = vadd.f32 %v398, %v402
    %408 = vrot.lane.b32.xlu0 %v377, 64
    %v409 = vpop.permute.xlu0 %408
    %410 = vrot.lane.b32.xlu0 %v378, 64
    %v411 = vpop.permute.xlu0 %410
    %v412 = vsel %vm157, %v409, %v411
    %v415 = vadd.f32 %v406, %v412
    %v416 = vadd.f32 %v407, %v411
    %417 = vrot.lane.b32.xlu0 %v377, 48
    %v418 = vpop.permute.xlu0 %417
    %419 = vrot.lane.b32.xlu0 %v378, 48
    %v420 = vpop.permute.xlu0 %419
    %v421 = vsel %vm167, %v418, %v420
    %v424 = vadd.f32 %v415, %v421
    %v425 = vadd.f32 %v416, %v420
    %426 = vrot.lane.b32.xlu0 %v377, 32
    %v427 = vpop.permute.xlu0 %426
    %428 = vrot.lane.b32.xlu0 %v378, 32
    %v429 = vpop.permute.xlu0 %428
    %v430 = vsel %vm177, %v427, %v429
    %v433 = vadd.f32 %v424, %v430
    %v434 = vadd.f32 %v425, %v429
    %437 = vrot.lane.b32.xlu0 %v265, 32
    %v438 = vpop.permute.xlu0 %437
    %439 = vrot.lane.b32.xlu0 %v266, 32
    %v440 = vpop.permute.xlu0 %439
    %v441 = vsel %vm177, %v438, %v440
    %446 = vrot.lane.b32.xlu0 %v349, 64
    %v447 = vpop.permute.xlu0 %446
    %448 = vrot.lane.b32.xlu0 %v350, 64
    %v449 = vpop.permute.xlu0 %448
    %v450 = vsel %vm157, %v447, %v449
    %455 = vrot.lane.b32.xlu0 %v433, 96
    %v456 = vpop.permute.xlu0 %455
    %457 = vrot.lane.b32.xlu0 %v434, 96
    %v458 = vpop.permute.xlu0 %457
    %v459 = vsel %vm137, %v456, %v458
    %v462 = vsel %vm177, %v182, %v438
    %v463 = vsel %vm157, %v441, %v447
    %v464 = vsel %vm137, %v450, %v456
    %v465 = vpack.c.bf16 %v181, %v181
    %v466 = vpack.c.bf16 %v462, %v462
    %v467 = vpack.c.bf16 %v463, %v463
    %v468 = vpack.c.bf16 %v464, %v464
    %v469 = vpack.c.bf16 %v459, %v459
    %v470 = vld [vmem:[#allocation9] sm:$0xff]
    %v471 = vld [vmem:[#allocation9 + $0x8] sm:$0xff]
    %v472 = vld [vmem:[#allocation9 + $0x10] sm:$0xff]
    %v473 = vld [vmem:[#allocation9 + $0x18] sm:$0xff]
    %v474 = vld [vmem:[#allocation9 + $0x20] sm:$0xff]
    %v475 = vld [vmem:[#allocation9 + $0x28] sm:$0xff]
    %v476 = vld [vmem:[#allocation9 + $0x30] sm:$0xff]
    %v477 = vld [vmem:[#allocation9 + $0x38] sm:$0xff]
    %v478 = vld [vmem:[#allocation9 + $0x40] sm:$0xff]
    %v479 = vld [vmem:[#allocation9 + $0x48] sm:$0xff]
    %v480 = vld [vmem:[#allocation9 + $0x50] sm:$0xff]
    %v481 = vld [vmem:[#allocation9 + $0x58] sm:$0xff]
    %v482 = vld [vmem:[#allocation9 + $0x60] sm:$0xff]
    %v483 = vld [vmem:[#allocation9 + $0x68] sm:$0xff]
    %v484 = vld [vmem:[#allocation9 + $0x70] sm:$0xff]
    %v485 = vld [vmem:[#allocation9 + $0x78] sm:$0xff]
    %v486 = vld [vmem:[#allocation9 + $0x80] sm:$0xff]
    %v487 = vld [vmem:[#allocation9 + $0x88] sm:$0xff]
    %v488 = vld [vmem:[#allocation9 + $0x90] sm:$0xff]
    %v489 = vld [vmem:[#allocation9 + $0x98] sm:$0xff]
    %v490 = vld [vmem:[#allocation9 + $0xa0] sm:$0xff]
    %v491 = vld [vmem:[#allocation9 + $0xa8] sm:$0xff]
    %v492 = vld [vmem:[#allocation9 + $0xb0] sm:$0xff]
    %v493 = vld [vmem:[#allocation9 + $0xb8] sm:$0xff]
    %v494 = vld [vmem:[#allocation9 + $0xc0] sm:$0xff]
    %v495 = vld [vmem:[#allocation9 + $0xc8] sm:$0xff]
    %v496 = vld [vmem:[#allocation9 + $0xd0] sm:$0xff]
    %v497 = vld [vmem:[#allocation9 + $0xd8] sm:$0xff]
    %v498 = vld [vmem:[#allocation9 + $0xe0] sm:$0xff]
    %v499 = vld [vmem:[#allocation9 + $0xe8] sm:$0xff]
    %v500 = vld [vmem:[#allocation9 + $0xf0] sm:$0xff]
    %v501 = vld [vmem:[#allocation9 + $0xf8] sm:$0xff]
    %v502 = vld [vmem:[#allocation9 + $0x100] sm:$0xff]
    %v503 = vld [vmem:[#allocation9 + $0x108] sm:$0xff]
    %v504 = vld [vmem:[#allocation9 + $0x110] sm:$0xff]
    %v505 = vld [vmem:[#allocation9 + $0x118] sm:$0xff]
    %v506 = vld [vmem:[#allocation9 + $0x120] sm:$0xff]
    %v507 = vld [vmem:[#allocation9 + $0x128] sm:$0xff]
    %v508 = vld [vmem:[#allocation9 + $0x130] sm:$0xff]
    %v509 = vld [vmem:[#allocation9 + $0x138] sm:$0xff]
    %v510 = vld [vmem:[#allocation9 + $0x140] sm:$0xff]
    %v511 = vld [vmem:[#allocation9 + $0x148] sm:$0xff]
    %v512 = vld [vmem:[#allocation9 + $0x150] sm:$0xff]
    %v513 = vld [vmem:[#allocation9 + $0x158] sm:$0xff]
    %v514 = vld [vmem:[#allocation9 + $0x160] sm:$0xff]
    %v515 = vld [vmem:[#allocation9 + $0x168] sm:$0xff]
    %v516 = vld [vmem:[#allocation9 + $0x170] sm:$0xff]
    %v517 = vld [vmem:[#allocation9 + $0x178] sm:$0xff]
    %v518 = vld [vmem:[#allocation9 + $0x180] sm:$0xff]
    %v519 = vld [vmem:[#allocation9 + $0x188] sm:$0xff]
    %v520 = vld [vmem:[#allocation9 + $0x190] sm:$0xff]
    %v521 = vld [vmem:[#allocation9 + $0x198] sm:$0xff]
    %v522 = vld [vmem:[#allocation9 + $0x1a0] sm:$0xff]
    %v523 = vld [vmem:[#allocation9 + $0x1a8] sm:$0xff]
    %v524 = vld [vmem:[#allocation9 + $0x1b0] sm:$0xff]
    %v525 = vld [vmem:[#allocation9 + $0x1b8] sm:$0xff]
    %v526 = vld [vmem:[#allocation9 + $0x1c0] sm:$0xff]
    %v527 = vld [vmem:[#allocation9 + $0x1c8] sm:$0xff]
    %v528 = vld [vmem:[#allocation9 + $0x1d0] sm:$0xff]
    %v529 = vld [vmem:[#allocation9 + $0x1d8] sm:$0xff]
    %v530 = vld [vmem:[#allocation9 + $0x1e0] sm:$0xff]
    %v531 = vld [vmem:[#allocation9 + $0x1e8] sm:$0xff]
    %v532 = vld [vmem:[#allocation9 + $0x1f0] sm:$0xff]
    %v533 = vld [vmem:[#allocation9 + $0x1f8] sm:$0xff]
    %v534 = vld [vmem:[#allocation9 + $0x200] sm:$0xff]
    %v535 = vld [vmem:[#allocation9 + $0x208] sm:$0xff]
    %v536 = vld [vmem:[#allocation9 + $0x210] sm:$0xff]
    %v537 = vld [vmem:[#allocation9 + $0x218] sm:$0xff]
    %v538 = vld [vmem:[#allocation9 + $0x220] sm:$0xff]
    %v539 = vld [vmem:[#allocation9 + $0x228] sm:$0xff]
    %v540 = vld [vmem:[#allocation9 + $0x230] sm:$0xff]
    %v541 = vld [vmem:[#allocation9 + $0x238] sm:$0xff]
    %v542 = vld [vmem:[#allocation9 + $0x240] sm:$0xff]
    %v543 = vld [vmem:[#allocation9 + $0x248] sm:$0xff]
    %v544 = vld [vmem:[#allocation9 + $0x250] sm:$0xff]
    %v545 = vld [vmem:[#allocation9 + $0x258] sm:$0xff]
    %v546 = vld [vmem:[#allocation9 + $0x260] sm:$0xff]
    %v547 = vld [vmem:[#allocation9 + $0x268] sm:$0xff]
    %v548 = vld [vmem:[#allocation9 + $0x270] sm:$0xff]
    %v549 = vld [vmem:[#allocation9 + $0x278] sm:$0xff]
    %v550 = vld [vmem:[#allocation9 + $0x280] sm:$0xff]
    %v551 = vld [vmem:[#allocation9 + $0x288] sm:$0xff]
    %v552 = vld [vmem:[#allocation9 + $0x290] sm:$0xff]
    %v553 = vld [vmem:[#allocation9 + $0x298] sm:$0xff]
    %v554 = vld [vmem:[#allocation9 + $0x2a0] sm:$0xff]
    %v555 = vld [vmem:[#allocation9 + $0x2a8] sm:$0xff]
    %v556 = vld [vmem:[#allocation9 + $0x2b0] sm:$0xff]
    %v557 = vld [vmem:[#allocation9 + $0x2b8] sm:$0xff]
    %v558 = vld [vmem:[#allocation9 + $0x2c0] sm:$0xff]
    %v559 = vld [vmem:[#allocation9 + $0x2c8] sm:$0xff]
    %v560 = vld [vmem:[#allocation9 + $0x2d0] sm:$0xff]
    %v561 = vld [vmem:[#allocation9 + $0x2d8] sm:$0xff]
    %v562 = vld [vmem:[#allocation9 + $0x2e0] sm:$0xff]
    %v563 = vld [vmem:[#allocation9 + $0x2e8] sm:$0xff]
    %v564 = vld [vmem:[#allocation9 + $0x2f0] sm:$0xff]
    %v565 = vld [vmem:[#allocation9 + $0x2f8] sm:$0xff]
    %v566 = vld [vmem:[#allocation9 + $0x300] sm:$0xff]
    %v567 = vld [vmem:[#allocation9 + $0x308] sm:$0xff]
    %v568 = vld [vmem:[#allocation9 + $0x310] sm:$0xff]
    %v569 = vld [vmem:[#allocation9 + $0x318] sm:$0xff]
    %v570 = vld [vmem:[#allocation9 + $0x320] sm:$0xff]
    %v571 = vld [vmem:[#allocation9 + $0x328] sm:$0xff]
    %v572 = vld [vmem:[#allocation9 + $0x330] sm:$0xff]
    %v573 = vld [vmem:[#allocation9 + $0x338] sm:$0xff]
    %v574 = vld [vmem:[#allocation9 + $0x340] sm:$0xff]
    %v575 = vld [vmem:[#allocation9 + $0x348] sm:$0xff]
    %v576 = vld [vmem:[#allocation9 + $0x350] sm:$0xff]
    %v577 = vld [vmem:[#allocation9 + $0x358] sm:$0xff]
    %v578 = vld [vmem:[#allocation9 + $0x360] sm:$0xff]
    %v579 = vld [vmem:[#allocation9 + $0x368] sm:$0xff]
    %v580 = vld [vmem:[#allocation9 + $0x370] sm:$0xff]
    %v581 = vld [vmem:[#allocation9 + $0x378] sm:$0xff]
    %v582 = vld [vmem:[#allocation9 + $0x380] sm:$0xff]
    %v583 = vld [vmem:[#allocation9 + $0x388] sm:$0xff]
    %v584 = vld [vmem:[#allocation9 + $0x390] sm:$0xff]
    %v585 = vld [vmem:[#allocation9 + $0x398] sm:$0xff]
    %v586 = vld [vmem:[#allocation9 + $0x3a0] sm:$0xff]
    %v587 = vld [vmem:[#allocation9 + $0x3a8] sm:$0xff]
    %v588 = vld [vmem:[#allocation9 + $0x3b0] sm:$0xff]
    %v589 = vld [vmem:[#allocation9 + $0x3b8] sm:$0xff]
    %v590 = vld [vmem:[#allocation9 + $0x3c0] sm:$0xff]
    %v591 = vld [vmem:[#allocation9 + $0x3c8] sm:$0xff]
    %v592 = vld [vmem:[#allocation9 + $0x3d0] sm:$0xff]
    %v593 = vld [vmem:[#allocation9 + $0x3d8] sm:$0xff]
    %v594 = vld [vmem:[#allocation9 + $0x3e0] sm:$0xff]
    %v595 = vld [vmem:[#allocation9 + $0x3e8] sm:$0xff]
    %v596 = vld [vmem:[#allocation9 + $0x3f0] sm:$0xff]
    %v597 = vld [vmem:[#allocation9 + $0x3f8] sm:$0xff]
    %v598 = vld [vmem:[#allocation9 + $0x400] sm:$0xff]
    %v599 = vld [vmem:[#allocation9 + $0x408] sm:$0xff]
    %v600 = vld [vmem:[#allocation9 + $0x410] sm:$0xff]
    %v601 = vld [vmem:[#allocation9 + $0x418] sm:$0xff]
    %v602 = vld [vmem:[#allocation9 + $0x420] sm:$0xff]
    %v603 = vld [vmem:[#allocation9 + $0x428] sm:$0xff]
    %v604 = vld [vmem:[#allocation9 + $0x430] sm:$0xff]
    %v605 = vld [vmem:[#allocation9 + $0x438] sm:$0xff]
    %v606 = vld [vmem:[#allocation9 + $0x440] sm:$0xff]
    %v607 = vld [vmem:[#allocation9 + $0x448] sm:$0xff]
    %v608 = vld [vmem:[#allocation9 + $0x450] sm:$0xff]
    %v609 = vld [vmem:[#allocation9 + $0x458] sm:$0xff]
    %v610 = vld [vmem:[#allocation9 + $0x460] sm:$0xff]
    %v611 = vld [vmem:[#allocation9 + $0x468] sm:$0xff]
    %v612 = vld [vmem:[#allocation9 + $0x470] sm:$0xff]
    %v613 = vld [vmem:[#allocation9 + $0x478] sm:$0xff]
    %v614 = vld [vmem:[#allocation9 + $0x480] sm:$0xff]
    %v615 = vld [vmem:[#allocation9 + $0x488] sm:$0xff]
    %v616 = vld [vmem:[#allocation9 + $0x490] sm:$0xff]
    %v617 = vld [vmem:[#allocation9 + $0x498] sm:$0xff]
    %v618 = vld [vmem:[#allocation9 + $0x4a0] sm:$0xff]
    %v619 = vld [vmem:[#allocation9 + $0x4a8] sm:$0xff]
    %v620 = vld [vmem:[#allocation9 + $0x4b0] sm:$0xff]
    %v621 = vld [vmem:[#allocation9 + $0x4b8] sm:$0xff]
    %v622 = vld [vmem:[#allocation9 + $0x4c0] sm:$0xff]
    %v623 = vld [vmem:[#allocation9 + $0x4c8] sm:$0xff]
    %v624 = vld [vmem:[#allocation9 + $0x4d0] sm:$0xff]
    %v625 = vld [vmem:[#allocation9 + $0x4d8] sm:$0xff]
    %v626 = vld [vmem:[#allocation9 + $0x4e0] sm:$0xff]
    %v627 = vld [vmem:[#allocation9 + $0x4e8] sm:$0xff]
    %v628 = vld [vmem:[#allocation9 + $0x4f0] sm:$0xff]
    %v629 = vld [vmem:[#allocation9 + $0x4f8] sm:$0xff]
    %v630 = vld [vmem:[#allocation9 + $0x500] sm:$0xff]
    %v631 = vld [vmem:[#allocation9 + $0x508] sm:$0xff]
    %v632 = vld [vmem:[#allocation9 + $0x510] sm:$0xff]
    %v633 = vld [vmem:[#allocation9 + $0x518] sm:$0xff]
    %v634 = vld [vmem:[#allocation9 + $0x520] sm:$0xff]
    %v635 = vld [vmem:[#allocation9 + $0x528] sm:$0xff]
    %v636 = vld [vmem:[#allocation9 + $0x530] sm:$0xff]
    %v637 = vld [vmem:[#allocation9 + $0x538] sm:$0xff]
    %v638 = vld [vmem:[#allocation9 + $0x540] sm:$0xff]
    %v639 = vld [vmem:[#allocation9 + $0x548] sm:$0xff]
    %v640 = vld [vmem:[#allocation9 + $0x550] sm:$0xff]
    %v641 = vld [vmem:[#allocation9 + $0x558] sm:$0xff]
    %v642 = vld [vmem:[#allocation9 + $0x560] sm:$0xff]
    %v643 = vld [vmem:[#allocation9 + $0x568] sm:$0xff]
    %v644 = vld [vmem:[#allocation9 + $0x570] sm:$0xff]
    %v645 = vld [vmem:[#allocation9 + $0x578] sm:$0xff]
    %v646 = vld [vmem:[#allocation9 + $0x580] sm:$0xff]
    %v647 = vld [vmem:[#allocation9 + $0x588] sm:$0xff]
    %v648 = vld [vmem:[#allocation9 + $0x590] sm:$0xff]
    %v649 = vld [vmem:[#allocation9 + $0x598] sm:$0xff]
    %v650 = vld [vmem:[#allocation9 + $0x5a0] sm:$0xff]
    %v651 = vld [vmem:[#allocation9 + $0x5a8] sm:$0xff]
    %v652 = vld [vmem:[#allocation9 + $0x5b0] sm:$0xff]
    %v653 = vld [vmem:[#allocation9 + $0x5b8] sm:$0xff]
    %v654 = vld [vmem:[#allocation9 + $0x5c0] sm:$0xff]
    %v655 = vld [vmem:[#allocation9 + $0x5c8] sm:$0xff]
    %v656 = vld [vmem:[#allocation9 + $0x5d0] sm:$0xff]
    %v657 = vld [vmem:[#allocation9 + $0x5d8] sm:$0xff]
    %v658 = vld [vmem:[#allocation9 + $0x5e0] sm:$0xff]
    %v659 = vld [vmem:[#allocation9 + $0x5e8] sm:$0xff]
    %v660 = vld [vmem:[#allocation9 + $0x5f0] sm:$0xff]
    %v661 = vld [vmem:[#allocation9 + $0x5f8] sm:$0xff]
    %v662 = vld [vmem:[#allocation9 + $0x600] sm:$0xff]
    %v663 = vld [vmem:[#allocation9 + $0x608] sm:$0xff]
    %v664 = vld [vmem:[#allocation9 + $0x610] sm:$0xff]
    %v665 = vld [vmem:[#allocation9 + $0x618] sm:$0xff]
    %v666 = vld [vmem:[#allocation9 + $0x620] sm:$0xff]
    %v667 = vld [vmem:[#allocation9 + $0x628] sm:$0xff]
    %v668 = vld [vmem:[#allocation9 + $0x630] sm:$0xff]
    %v669 = vld [vmem:[#allocation9 + $0x638] sm:$0xff]
    %v670 = vld [vmem:[#allocation9 + $0x640] sm:$0xff]
    %v671 = vld [vmem:[#allocation9 + $0x648] sm:$0xff]
    %v672 = vld [vmem:[#allocation9 + $0x650] sm:$0xff]
    %v673 = vld [vmem:[#allocation9 + $0x658] sm:$0xff]
    %v674 = vld [vmem:[#allocation9 + $0x660] sm:$0xff]
    %v675 = vld [vmem:[#allocation9 + $0x668] sm:$0xff]
    %v676 = vld [vmem:[#allocation9 + $0x670] sm:$0xff]
    %v677 = vld [vmem:[#allocation9 + $0x678] sm:$0xff]
    %v678 = vld [vmem:[#allocation9 + $0x680] sm:$0xff]
    %v679 = vld [vmem:[#allocation9 + $0x688] sm:$0xff]
    %v680 = vld [vmem:[#allocation9 + $0x690] sm:$0xff]
    %v681 = vld [vmem:[#allocation9 + $0x698] sm:$0xff]
    %v682 = vld [vmem:[#allocation9 + $0x6a0] sm:$0xff]
    %v683 = vld [vmem:[#allocation9 + $0x6a8] sm:$0xff]
    %v684 = vld [vmem:[#allocation9 + $0x6b0] sm:$0xff]
    %v685 = vld [vmem:[#allocation9 + $0x6b8] sm:$0xff]
    %v686 = vld [vmem:[#allocation9 + $0x6c0] sm:$0xff]
    %v687 = vld [vmem:[#allocation9 + $0x6c8] sm:$0xff]
    %v688 = vld [vmem:[#allocation9 + $0x6d0] sm:$0xff]
    %v689 = vld [vmem:[#allocation9 + $0x6d8] sm:$0xff]
    %v690 = vld [vmem:[#allocation9 + $0x6e0] sm:$0xff]
    %v691 = vld [vmem:[#allocation9 + $0x6e8] sm:$0xff]
    %v692 = vld [vmem:[#allocation9 + $0x6f0] sm:$0xff]
    %v693 = vld [vmem:[#allocation9 + $0x6f8] sm:$0xff]
    %v694 = vld [vmem:[#allocation9 + $0x700] sm:$0xff]
    %v695 = vld [vmem:[#allocation9 + $0x708] sm:$0xff]
    %v696 = vld [vmem:[#allocation9 + $0x710] sm:$0xff]
    %v697 = vld [vmem:[#allocation9 + $0x718] sm:$0xff]
    %v698 = vld [vmem:[#allocation9 + $0x720] sm:$0xff]
    %v699 = vld [vmem:[#allocation9 + $0x728] sm:$0xff]
    %v700 = vld [vmem:[#allocation9 + $0x730] sm:$0xff]
    %v701 = vld [vmem:[#allocation9 + $0x738] sm:$0xff]
    %v702 = vld [vmem:[#allocation9 + $0x740] sm:$0xff]
    %v703 = vld [vmem:[#allocation9 + $0x748] sm:$0xff]
    %v704 = vld [vmem:[#allocation9 + $0x750] sm:$0xff]
    %v705 = vld [vmem:[#allocation9 + $0x758] sm:$0xff]
    %v706 = vld [vmem:[#allocation9 + $0x760] sm:$0xff]
    %v707 = vld [vmem:[#allocation9 + $0x768] sm:$0xff]
    %v708 = vld [vmem:[#allocation9 + $0x770] sm:$0xff]
    %v709 = vld [vmem:[#allocation9 + $0x778] sm:$0xff]
    %v710 = vld [vmem:[#allocation9 + $0x780] sm:$0xff]
    %v711 = vld [vmem:[#allocation9 + $0x788] sm:$0xff]
    %v712 = vld [vmem:[#allocation9 + $0x790] sm:$0xff]
    %v713 = vld [vmem:[#allocation9 + $0x798] sm:$0xff]
    %v714 = vld [vmem:[#allocation9 + $0x7a0] sm:$0xff]
    %v715 = vld [vmem:[#allocation9 + $0x7a8] sm:$0xff]
    %v716 = vld [vmem:[#allocation9 + $0x7b0] sm:$0xff]
    %v717 = vld [vmem:[#allocation9 + $0x7b8] sm:$0xff]
    %v718 = vld [vmem:[#allocation9 + $0x7c0] sm:$0xff]
    %v719 = vld [vmem:[#allocation9 + $0x7c8] sm:$0xff]
    %v720 = vld [vmem:[#allocation9 + $0x7d0] sm:$0xff]
    %v721 = vld [vmem:[#allocation9 + $0x7d8] sm:$0xff]
    %v722 = vld [vmem:[#allocation9 + $0x7e0] sm:$0xff]
    %v723 = vld [vmem:[#allocation9 + $0x7e8] sm:$0xff]
    %v724 = vld [vmem:[#allocation9 + $0x7f0] sm:$0xff]
    %v725 = vld [vmem:[#allocation9 + $0x7f8] sm:$0xff]
    %v726 = vld [vmem:[#allocation9 + $0x800] sm:$0xff]
    %v727 = vld [vmem:[#allocation9 + $0x808] sm:$0xff]
    %v728 = vld [vmem:[#allocation9 + $0x810] sm:$0xff]
    %v729 = vld [vmem:[#allocation9 + $0x818] sm:$0xff]
    %v730 = vld [vmem:[#allocation9 + $0x820] sm:$0xff]
    %v731 = vld [vmem:[#allocation9 + $0x828] sm:$0xff]
    %v732 = vld [vmem:[#allocation9 + $0x830] sm:$0xff]
    %v733 = vld [vmem:[#allocation9 + $0x838] sm:$0xff]
    %v734 = vld [vmem:[#allocation9 + $0x840] sm:$0xff]
    %v735 = vld [vmem:[#allocation9 + $0x848] sm:$0xff]
    %v736 = vld [vmem:[#allocation9 + $0x850] sm:$0xff]
    %v737 = vld [vmem:[#allocation9 + $0x858] sm:$0xff]
    %v738 = vld [vmem:[#allocation9 + $0x860] sm:$0xff]
    %v739 = vld [vmem:[#allocation9 + $0x868] sm:$0xff]
    %v740 = vld [vmem:[#allocation9 + $0x870] sm:$0xff]
    %v741 = vld [vmem:[#allocation9 + $0x878] sm:$0xff]
    %v742 = vld [vmem:[#allocation9 + $0x880] sm:$0xff]
    %v743 = vld [vmem:[#allocation9 + $0x888] sm:$0xff]
    %v744 = vld [vmem:[#allocation9 + $0x890] sm:$0xff]
    %v745 = vld [vmem:[#allocation9 + $0x898] sm:$0xff]
    %v746 = vld [vmem:[#allocation9 + $0x8a0] sm:$0xff]
    %v747 = vld [vmem:[#allocation9 + $0x8a8] sm:$0xff]
    %v748 = vld [vmem:[#allocation9 + $0x8b0] sm:$0xff]
    %v749 = vld [vmem:[#allocation9 + $0x8b8] sm:$0xff]
    %v750 = vld [vmem:[#allocation9 + $0x8c0] sm:$0xff]
    %v751 = vld [vmem:[#allocation9 + $0x8c8] sm:$0xff]
    %v752 = vld [vmem:[#allocation9 + $0x8d0] sm:$0xff]
    %v753 = vld [vmem:[#allocation9 + $0x8d8] sm:$0xff]
    %v754 = vld [vmem:[#allocation9 + $0x8e0] sm:$0xff]
    %v755 = vld [vmem:[#allocation9 + $0x8e8] sm:$0xff]
    %v756 = vld [vmem:[#allocation9 + $0x8f0] sm:$0xff]
    %v757 = vld [vmem:[#allocation9 + $0x8f8] sm:$0xff]
    %v758 = vld [vmem:[#allocation9 + $0x900] sm:$0xff]
    %v759 = vld [vmem:[#allocation9 + $0x908] sm:$0xff]
    %v760 = vld [vmem:[#allocation9 + $0x910] sm:$0xff]
    %v761 = vld [vmem:[#allocation9 + $0x918] sm:$0xff]
    %v762 = vld [vmem:[#allocation9 + $0x920] sm:$0xff]
    %v763 = vld [vmem:[#allocation9 + $0x928] sm:$0xff]
    %v764 = vld [vmem:[#allocation9 + $0x930] sm:$0xff]
    %v765 = vld [vmem:[#allocation9 + $0x938] sm:$0xff]
    %v766 = vld [vmem:[#allocation9 + $0x940] sm:$0xff]
    %v767 = vld [vmem:[#allocation9 + $0x948] sm:$0xff]
    %v768 = vld [vmem:[#allocation9 + $0x950] sm:$0xff]
    %v769 = vld [vmem:[#allocation9 + $0x958] sm:$0xff]
    %v770 = vld [vmem:[#allocation9 + $0x960] sm:$0xff]
    %v771 = vld [vmem:[#allocation9 + $0x968] sm:$0xff]
    %v772 = vld [vmem:[#allocation9 + $0x970] sm:$0xff]
    %v773 = vld [vmem:[#allocation9 + $0x978] sm:$0xff]
    %v774 = vld [vmem:[#allocation9 + $0x980] sm:$0xff]
    %v775 = vld [vmem:[#allocation9 + $0x988] sm:$0xff]
    %v776 = vld [vmem:[#allocation9 + $0x990] sm:$0xff]
    %v777 = vld [vmem:[#allocation9 + $0x998] sm:$0xff]
    %v778 = vld [vmem:[#allocation9 + $0x9a0] sm:$0xff]
    %v779 = vld [vmem:[#allocation9 + $0x9a8] sm:$0xff]
    %v780 = vld [vmem:[#allocation9 + $0x9b0] sm:$0xff]
    %v781 = vld [vmem:[#allocation9 + $0x9b8] sm:$0xff]
    %v782 = vld [vmem:[#allocation9 + $0x9c0] sm:$0xff]
    %v783 = vld [vmem:[#allocation9 + $0x9c8] sm:$0xff]
    %v784 = vld [vmem:[#allocation9 + $0x9d0] sm:$0xff]
    %v785 = vld [vmem:[#allocation9 + $0x9d8] sm:$0xff]
    %v786 = vld [vmem:[#allocation9 + $0x9e0] sm:$0xff]
    %v787 = vld [vmem:[#allocation9 + $0x9e8] sm:$0xff]
    %v788 = vld [vmem:[#allocation9 + $0x9f0] sm:$0xff]
    %v789 = vld [vmem:[#allocation9 + $0x9f8] sm:$0xff]
    %v790 = vld [vmem:[#allocation11] sm:$0xff]
    %v792 = vlaneseq
    %v793 = vshrl.u32 %v792, 7
    %v794 = vsub.s32 0, %v793
    %v795 = vrot.slane %v790, %v794
    %v796 = vlaneseq
    %v797 = vshrl.u32 %v796, 7
    %v798 = vsub.s32 1, %v797
    %v799 = vrot.slane %v790, %v798
    %v800 = vlaneseq
    %v801 = vshrl.u32 %v800, 7
    %v802 = vsub.s32 2, %v801
    %v803 = vrot.slane %v790, %v802
    %v804 = vlaneseq
    %v805 = vshrl.u32 %v804, 7
    %v806 = vsub.s32 3, %v805
    %v807 = vrot.slane %v790, %v806
    %v808 = vlaneseq
    %v809 = vshrl.u32 %v808, 7
    %v810 = vsub.s32 4, %v809
    %v811 = vrot.slane %v790, %v810
    %v812 = vlaneseq
    %v813 = vshrl.u32 %v812, 7
    %v814 = vsub.s32 5, %v813
    %v815 = vrot.slane %v790, %v814
    %v816 = vlaneseq
    %v817 = vshrl.u32 %v816, 7
    %v818 = vsub.s32 6, %v817
    %v819 = vrot.slane %v790, %v818
    %v820 = vlaneseq
    %v821 = vshrl.u32 %v820, 7
    %v822 = vsub.s32 7, %v821
    %v823 = vrot.slane %v790, %v822
    %v1152 = vunpack.c.l.b16 %v470
    %v1153 = vunpack.c.h.b16 %v470
    %v1154 = vunpack.c.l.b16 %v471
    %v1155 = vunpack.c.h.b16 %v471
    %v1156 = vunpack.c.l.b16 %v472
    %v1157 = vunpack.c.h.b16 %v472
    %v1158 = vunpack.c.l.b16 %v473
    %v1159 = vunpack.c.h.b16 %v473
    %v1160 = vunpack.c.l.b16 %v474
    %v1161 = vunpack.c.h.b16 %v474
    %v1162 = vunpack.c.l.b16 %v475
    %v1163 = vunpack.c.h.b16 %v475
    %v1164 = vunpack.c.l.b16 %v476
    %v1165 = vunpack.c.h.b16 %v476
    %v1166 = vunpack.c.l.b16 %v477
    %v1167 = vunpack.c.h.b16 %v477
    %v1168 = vunpack.c.l.b16 %v478
    %v1169 = vunpack.c.h.b16 %v478
    %v1170 = vunpack.c.l.b16 %v479
    %v1171 = vunpack.c.h.b16 %v479
    %v1172 = vunpack.c.l.b16 %v480
    %v1173 = vunpack.c.h.b16 %v480
    %v1174 = vunpack.c.l.b16 %v481
    %v1175 = vunpack.c.h.b16 %v481
    %v1176 = vunpack.c.l.b16 %v482
    %v1177 = vunpack.c.h.b16 %v482
    %v1178 = vunpack.c.l.b16 %v483
    %v1179 = vunpack.c.h.b16 %v483
    %v1180 = vunpack.c.l.b16 %v484
    %v1181 = vunpack.c.h.b16 %v484
    %v1182 = vunpack.c.l.b16 %v485
    %v1183 = vunpack.c.h.b16 %v485
    %v1184 = vunpack.c.l.b16 %v486
    %v1185 = vunpack.c.h.b16 %v486
    %v1186 = vunpack.c.l.b16 %v487
    %v1187 = vunpack.c.h.b16 %v487
    %v1188 = vunpack.c.l.b16 %v488
    %v1189 = vunpack.c.h.b16 %v488
    %v1190 = vunpack.c.l.b16 %v489
    %v1191 = vunpack.c.h.b16 %v489
    %v1192 = vunpack.c.l.b16 %v490
    %v1193 = vunpack.c.h.b16 %v490
    %v1194 = vunpack.c.l.b16 %v491
    %v1195 = vunpack.c.h.b16 %v491
    %v1196 = vunpack.c.l.b16 %v492
    %v1197 = vunpack.c.h.b16 %v492
    %v1198 = vunpack.c.l.b16 %v493
    %v1199 = vunpack.c.h.b16 %v493
    %v1200 = vunpack.c.l.b16 %v494
    %v1201 = vunpack.c.h.b16 %v494
    %v1202 = vunpack.c.l.b16 %v495
    %v1203 = vunpack.c.h.b16 %v495
    %v1204 = vunpack.c.l.b16 %v496
    %v1205 = vunpack.c.h.b16 %v496
    %v1206 = vunpack.c.l.b16 %v497
    %v1207 = vunpack.c.h.b16 %v497
    %v1208 = vunpack.c.l.b16 %v498
    %v1209 = vunpack.c.h.b16 %v498
    %v1210 = vunpack.c.l.b16 %v499
    %v1211 = vunpack.c.h.b16 %v499
    %v1212 = vunpack.c.l.b16 %v500
    %v1213 = vunpack.c.h.b16 %v500
    %v1214 = vunpack.c.l.b16 %v501
    %v1215 = vunpack.c.h.b16 %v501
    %v1216 = vunpack.c.l.b16 %v502
    %v1217 = vunpack.c.h.b16 %v502
    %v1218 = vunpack.c.l.b16 %v503
    %v1219 = vunpack.c.h.b16 %v503
    %v1220 = vunpack.c.l.b16 %v504
    %v1221 = vunpack.c.h.b16 %v504
    %v1222 = vunpack.c.l.b16 %v505
    %v1223 = vunpack.c.h.b16 %v505
    %v1224 = vunpack.c.l.b16 %v506
    %v1225 = vunpack.c.h.b16 %v506
    %v1226 = vunpack.c.l.b16 %v507
    %v1227 = vunpack.c.h.b16 %v507
    %v1228 = vunpack.c.l.b16 %v508
    %v1229 = vunpack.c.h.b16 %v508
    %v1230 = vunpack.c.l.b16 %v509
    %v1231 = vunpack.c.h.b16 %v509
    %v1232 = vunpack.c.l.b16 %v510
    %v1233 = vunpack.c.h.b16 %v510
    %v1234 = vunpack.c.l.b16 %v511
    %v1235 = vunpack.c.h.b16 %v511
    %v1236 = vunpack.c.l.b16 %v512
    %v1237 = vunpack.c.h.b16 %v512
    %v1238 = vunpack.c.l.b16 %v513
    %v1239 = vunpack.c.h.b16 %v513
    %v1240 = vunpack.c.l.b16 %v514
    %v1241 = vunpack.c.h.b16 %v514
    %v1242 = vunpack.c.l.b16 %v515
    %v1243 = vunpack.c.h.b16 %v515
    %v1244 = vunpack.c.l.b16 %v516
    %v1245 = vunpack.c.h.b16 %v516
    %v1246 = vunpack.c.l.b16 %v517
    %v1247 = vunpack.c.h.b16 %v517
    %v1248 = vunpack.c.l.b16 %v518
    %v1249 = vunpack.c.h.b16 %v518
    %v1250 = vunpack.c.l.b16 %v519
    %v1251 = vunpack.c.h.b16 %v519
    %v1252 = vunpack.c.l.b16 %v520
    %v1253 = vunpack.c.h.b16 %v520
    %v1254 = vunpack.c.l.b16 %v521
    %v1255 = vunpack.c.h.b16 %v521
    %v1256 = vunpack.c.l.b16 %v522
    %v1257 = vunpack.c.h.b16 %v522
    %v1258 = vunpack.c.l.b16 %v523
    %v1259 = vunpack.c.h.b16 %v523
    %v1260 = vunpack.c.l.b16 %v524
    %v1261 = vunpack.c.h.b16 %v524
    %v1262 = vunpack.c.l.b16 %v525
    %v1263 = vunpack.c.h.b16 %v525
    %v1264 = vunpack.c.l.b16 %v526
    %v1265 = vunpack.c.h.b16 %v526
    %v1266 = vunpack.c.l.b16 %v527
    %v1267 = vunpack.c.h.b16 %v527
    %v1268 = vunpack.c.l.b16 %v528
    %v1269 = vunpack.c.h.b16 %v528
    %v1270 = vunpack.c.l.b16 %v529
    %v1271 = vunpack.c.h.b16 %v529
    %v1272 = vunpack.c.l.b16 %v530
    %v1273 = vunpack.c.h.b16 %v530
    %v1274 = vunpack.c.l.b16 %v531
    %v1275 = vunpack.c.h.b16 %v531
    %v1276 = vunpack.c.l.b16 %v532
    %v1277 = vunpack.c.h.b16 %v532
    %v1278 = vunpack.c.l.b16 %v533
    %v1279 = vunpack.c.h.b16 %v533
    %v1280 = vunpack.c.l.b16 %v534
    %v1281 = vunpack.c.h.b16 %v534
    %v1282 = vunpack.c.l.b16 %v535
    %v1283 = vunpack.c.h.b16 %v535
    %v1284 = vunpack.c.l.b16 %v536
    %v1285 = vunpack.c.h.b16 %v536
    %v1286 = vunpack.c.l.b16 %v537
    %v1287 = vunpack.c.h.b16 %v537
    %v1288 = vunpack.c.l.b16 %v538
    %v1289 = vunpack.c.h.b16 %v538
    %v1290 = vunpack.c.l.b16 %v539
    %v1291 = vunpack.c.h.b16 %v539
    %v1292 = vunpack.c.l.b16 %v540
    %v1293 = vunpack.c.h.b16 %v540
    %v1294 = vunpack.c.l.b16 %v541
    %v1295 = vunpack.c.h.b16 %v541
    %v1296 = vunpack.c.l.b16 %v542
    %v1297 = vunpack.c.h.b16 %v542
    %v1298 = vunpack.c.l.b16 %v543
    %v1299 = vunpack.c.h.b16 %v543
    %v1300 = vunpack.c.l.b16 %v544
    %v1301 = vunpack.c.h.b16 %v544
    %v1302 = vunpack.c.l.b16 %v545
    %v1303 = vunpack.c.h.b16 %v545
    %v1304 = vunpack.c.l.b16 %v546
    %v1305 = vunpack.c.h.b16 %v546
    %v1306 = vunpack.c.l.b16 %v547
    %v1307 = vunpack.c.h.b16 %v547
    %v1308 = vunpack.c.l.b16 %v548
    %v1309 = vunpack.c.h.b16 %v548
    %v1310 = vunpack.c.l.b16 %v549
    %v1311 = vunpack.c.h.b16 %v549
    %v1312 = vunpack.c.l.b16 %v550
    %v1313 = vunpack.c.h.b16 %v550
    %v1314 = vunpack.c.l.b16 %v551
    %v1315 = vunpack.c.h.b16 %v551
    %v1316 = vunpack.c.l.b16 %v552
    %v1317 = vunpack.c.h.b16 %v552
    %v1318 = vunpack.c.l.b16 %v553
    %v1319 = vunpack.c.h.b16 %v553
    %v1320 = vunpack.c.l.b16 %v554
    %v1321 = vunpack.c.h.b16 %v554
    %v1322 = vunpack.c.l.b16 %v555
    %v1323 = vunpack.c.h.b16 %v555
    %v1324 = vunpack.c.l.b16 %v556
    %v1325 = vunpack.c.h.b16 %v556
    %v1326 = vunpack.c.l.b16 %v557
    %v1327 = vunpack.c.h.b16 %v557
    %v1328 = vunpack.c.l.b16 %v558
    %v1329 = vunpack.c.h.b16 %v558
    %v1330 = vunpack.c.l.b16 %v559
    %v1331 = vunpack.c.h.b16 %v559
    %v1332 = vunpack.c.l.b16 %v560
    %v1333 = vunpack.c.h.b16 %v560
    %v1334 = vunpack.c.l.b16 %v561
    %v1335 = vunpack.c.h.b16 %v561
    %v1336 = vunpack.c.l.b16 %v562
    %v1337 = vunpack.c.h.b16 %v562
    %v1338 = vunpack.c.l.b16 %v563
    %v1339 = vunpack.c.h.b16 %v563
    %v1340 = vunpack.c.l.b16 %v564
    %v1341 = vunpack.c.h.b16 %v564
    %v1342 = vunpack.c.l.b16 %v565
    %v1343 = vunpack.c.h.b16 %v565
    %v1344 = vunpack.c.l.b16 %v566
    %v1345 = vunpack.c.h.b16 %v566
    %v1346 = vunpack.c.l.b16 %v567
    %v1347 = vunpack.c.h.b16 %v567
    %v1348 = vunpack.c.l.b16 %v568
    %v1349 = vunpack.c.h.b16 %v568
    %v1350 = vunpack.c.l.b16 %v569
    %v1351 = vunpack.c.h.b16 %v569
    %v1352 = vunpack.c.l.b16 %v570
    %v1353 = vunpack.c.h.b16 %v570
    %v1354 = vunpack.c.l.b16 %v571
    %v1355 = vunpack.c.h.b16 %v571
    %v1356 = vunpack.c.l.b16 %v572
    %v1357 = vunpack.c.h.b16 %v572
    %v1358 = vunpack.c.l.b16 %v573
    %v1359 = vunpack.c.h.b16 %v573
    %v1360 = vunpack.c.l.b16 %v574
    %v1361 = vunpack.c.h.b16 %v574
    %v1362 = vunpack.c.l.b16 %v575
    %v1363 = vunpack.c.h.b16 %v575
    %v1364 = vunpack.c.l.b16 %v576
    %v1365 = vunpack.c.h.b16 %v576
    %v1366 = vunpack.c.l.b16 %v577
    %v1367 = vunpack.c.h.b16 %v577
    %v1368 = vunpack.c.l.b16 %v578
    %v1369 = vunpack.c.h.b16 %v578
    %v1370 = vunpack.c.l.b16 %v579
    %v1371 = vunpack.c.h.b16 %v579
    %v1372 = vunpack.c.l.b16 %v580
    %v1373 = vunpack.c.h.b16 %v580
    %v1374 = vunpack.c.l.b16 %v581
    %v1375 = vunpack.c.h.b16 %v581
    %v1376 = vunpack.c.l.b16 %v582
    %v1377 = vunpack.c.h.b16 %v582
    %v1378 = vunpack.c.l.b16 %v583
    %v1379 = vunpack.c.h.b16 %v583
    %v1380 = vunpack.c.l.b16 %v584
    %v1381 = vunpack.c.h.b16 %v584
    %v1382 = vunpack.c.l.b16 %v585
    %v1383 = vunpack.c.h.b16 %v585
    %v1384 = vunpack.c.l.b16 %v586
    %v1385 = vunpack.c.h.b16 %v586
    %v1386 = vunpack.c.l.b16 %v587
    %v1387 = vunpack.c.h.b16 %v587
    %v1388 = vunpack.c.l.b16 %v588
    %v1389 = vunpack.c.h.b16 %v588
    %v1390 = vunpack.c.l.b16 %v589
    %v1391 = vunpack.c.h.b16 %v589
    %v1392 = vunpack.c.l.b16 %v590
    %v1393 = vunpack.c.h.b16 %v590
    %v1394 = vunpack.c.l.b16 %v591
    %v1395 = vunpack.c.h.b16 %v591
    %v1396 = vunpack.c.l.b16 %v592
    %v1397 = vunpack.c.h.b16 %v592
    %v1398 = vunpack.c.l.b16 %v593
    %v1399 = vunpack.c.h.b16 %v593
    %v1400 = vunpack.c.l.b16 %v594
    %v1401 = vunpack.c.h.b16 %v594
    %v1402 = vunpack.c.l.b16 %v595
    %v1403 = vunpack.c.h.b16 %v595
    %v1404 = vunpack.c.l.b16 %v596
    %v1405 = vunpack.c.h.b16 %v596
    %v1406 = vunpack.c.l.b16 %v597
    %v1407 = vunpack.c.h.b16 %v597
    %v1408 = vunpack.c.l.b16 %v598
    %v1409 = vunpack.c.h.b16 %v598
    %v1410 = vunpack.c.l.b16 %v599
    %v1411 = vunpack.c.h.b16 %v599
    %v1412 = vunpack.c.l.b16 %v600
    %v1413 = vunpack.c.h.b16 %v600
    %v1414 = vunpack.c.l.b16 %v601
    %v1415 = vunpack.c.h.b16 %v601
    %v1416 = vunpack.c.l.b16 %v602
    %v1417 = vunpack.c.h.b16 %v602
    %v1418 = vunpack.c.l.b16 %v603
    %v1419 = vunpack.c.h.b16 %v603
    %v1420 = vunpack.c.l.b16 %v604
    %v1421 = vunpack.c.h.b16 %v604
    %v1422 = vunpack.c.l.b16 %v605
    %v1423 = vunpack.c.h.b16 %v605
    %v1424 = vunpack.c.l.b16 %v606
    %v1425 = vunpack.c.h.b16 %v606
    %v1426 = vunpack.c.l.b16 %v607
    %v1427 = vunpack.c.h.b16 %v607
    %v1428 = vunpack.c.l.b16 %v608
    %v1429 = vunpack.c.h.b16 %v608
    %v1430 = vunpack.c.l.b16 %v609
    %v1431 = vunpack.c.h.b16 %v609
    %v1432 = vunpack.c.l.b16 %v610
    %v1433 = vunpack.c.h.b16 %v610
    %v1434 = vunpack.c.l.b16 %v611
    %v1435 = vunpack.c.h.b16 %v611
    %v1436 = vunpack.c.l.b16 %v612
    %v1437 = vunpack.c.h.b16 %v612
    %v1438 = vunpack.c.l.b16 %v613
    %v1439 = vunpack.c.h.b16 %v613
    %v1440 = vunpack.c.l.b16 %v614
    %v1441 = vunpack.c.h.b16 %v614
    %v1442 = vunpack.c.l.b16 %v615
    %v1443 = vunpack.c.h.b16 %v615
    %v1444 = vunpack.c.l.b16 %v616
    %v1445 = vunpack.c.h.b16 %v616
    %v1446 = vunpack.c.l.b16 %v617
    %v1447 = vunpack.c.h.b16 %v617
    %v1448 = vunpack.c.l.b16 %v618
    %v1449 = vunpack.c.h.b16 %v618
    %v1450 = vunpack.c.l.b16 %v619
    %v1451 = vunpack.c.h.b16 %v619
    %v1452 = vunpack.c.l.b16 %v620
    %v1453 = vunpack.c.h.b16 %v620
    %v1454 = vunpack.c.l.b16 %v621
    %v1455 = vunpack.c.h.b16 %v621
    %v1456 = vunpack.c.l.b16 %v622
    %v1457 = vunpack.c.h.b16 %v622
    %v1458 = vunpack.c.l.b16 %v623
    %v1459 = vunpack.c.h.b16 %v623
    %v1460 = vunpack.c.l.b16 %v624
    %v1461 = vunpack.c.h.b16 %v624
    %v1462 = vunpack.c.l.b16 %v625
    %v1463 = vunpack.c.h.b16 %v625
    %v1464 = vunpack.c.l.b16 %v626
    %v1465 = vunpack.c.h.b16 %v626
    %v1466 = vunpack.c.l.b16 %v627
    %v1467 = vunpack.c.h.b16 %v627
    %v1468 = vunpack.c.l.b16 %v628
    %v1469 = vunpack.c.h.b16 %v628
    %v1470 = vunpack.c.l.b16 %v629
    %v1471 = vunpack.c.h.b16 %v629
    %v1472 = vunpack.c.l.b16 %v630
    %v1473 = vunpack.c.h.b16 %v630
    %v1474 = vunpack.c.l.b16 %v631
    %v1475 = vunpack.c.h.b16 %v631
    %v1476 = vunpack.c.l.b16 %v632
    %v1477 = vunpack.c.h.b16 %v632
    %v1478 = vunpack.c.l.b16 %v633
    %v1479 = vunpack.c.h.b16 %v633
    %v1480 = vunpack.c.l.b16 %v634
    %v1481 = vunpack.c.h.b16 %v634
    %v1482 = vunpack.c.l.b16 %v635
    %v1483 = vunpack.c.h.b16 %v635
    %v1484 = vunpack.c.l.b16 %v636
    %v1485 = vunpack.c.h.b16 %v636
    %v1486 = vunpack.c.l.b16 %v637
    %v1487 = vunpack.c.h.b16 %v637
    %v1488 = vunpack.c.l.b16 %v638
    %v1489 = vunpack.c.h.b16 %v638
    %v1490 = vunpack.c.l.b16 %v639
    %v1491 = vunpack.c.h.b16 %v639
    %v1492 = vunpack.c.l.b16 %v640
    %v1493 = vunpack.c.h.b16 %v640
    %v1494 = vunpack.c.l.b16 %v641
    %v1495 = vunpack.c.h.b16 %v641
    %v1496 = vunpack.c.l.b16 %v642
    %v1497 = vunpack.c.h.b16 %v642
    %v1498 = vunpack.c.l.b16 %v643
    %v1499 = vunpack.c.h.b16 %v643
    %v1500 = vunpack.c.l.b16 %v644
    %v1501 = vunpack.c.h.b16 %v644
    %v1502 = vunpack.c.l.b16 %v645
    %v1503 = vunpack.c.h.b16 %v645
    %v1504 = vunpack.c.l.b16 %v646
    %v1505 = vunpack.c.h.b16 %v646
    %v1506 = vunpack.c.l.b16 %v647
    %v1507 = vunpack.c.h.b16 %v647
    %v1508 = vunpack.c.l.b16 %v648
    %v1509 = vunpack.c.h.b16 %v648
    %v1510 = vunpack.c.l.b16 %v649
    %v1511 = vunpack.c.h.b16 %v649
    %v1512 = vunpack.c.l.b16 %v650
    %v1513 = vunpack.c.h.b16 %v650
    %v1514 = vunpack.c.l.b16 %v651
    %v1515 = vunpack.c.h.b16 %v651
    %v1516 = vunpack.c.l.b16 %v652
    %v1517 = vunpack.c.h.b16 %v652
    %v1518 = vunpack.c.l.b16 %v653
    %v1519 = vunpack.c.h.b16 %v653
    %v1520 = vunpack.c.l.b16 %v654
    %v1521 = vunpack.c.h.b16 %v654
    %v1522 = vunpack.c.l.b16 %v655
    %v1523 = vunpack.c.h.b16 %v655
    %v1524 = vunpack.c.l.b16 %v656
    %v1525 = vunpack.c.h.b16 %v656
    %v1526 = vunpack.c.l.b16 %v657
    %v1527 = vunpack.c.h.b16 %v657
    %v1528 = vunpack.c.l.b16 %v658
    %v1529 = vunpack.c.h.b16 %v658
    %v1530 = vunpack.c.l.b16 %v659
    %v1531 = vunpack.c.h.b16 %v659
    %v1532 = vunpack.c.l.b16 %v660
    %v1533 = vunpack.c.h.b16 %v660
    %v1534 = vunpack.c.l.b16 %v661
    %v1535 = vunpack.c.h.b16 %v661
    %v1536 = vunpack.c.l.b16 %v662
    %v1537 = vunpack.c.h.b16 %v662
    %v1538 = vunpack.c.l.b16 %v663
    %v1539 = vunpack.c.h.b16 %v663
    %v1540 = vunpack.c.l.b16 %v664
    %v1541 = vunpack.c.h.b16 %v664
    %v1542 = vunpack.c.l.b16 %v665
    %v1543 = vunpack.c.h.b16 %v665
    %v1544 = vunpack.c.l.b16 %v666
    %v1545 = vunpack.c.h.b16 %v666
    %v1546 = vunpack.c.l.b16 %v667
    %v1547 = vunpack.c.h.b16 %v667
    %v1548 = vunpack.c.l.b16 %v668
    %v1549 = vunpack.c.h.b16 %v668
    %v1550 = vunpack.c.l.b16 %v669
    %v1551 = vunpack.c.h.b16 %v669
    %v1552 = vunpack.c.l.b16 %v670
    %v1553 = vunpack.c.h.b16 %v670
    %v1554 = vunpack.c.l.b16 %v671
    %v1555 = vunpack.c.h.b16 %v671
    %v1556 = vunpack.c.l.b16 %v672
    %v1557 = vunpack.c.h.b16 %v672
    %v1558 = vunpack.c.l.b16 %v673
    %v1559 = vunpack.c.h.b16 %v673
    %v1560 = vunpack.c.l.b16 %v674
    %v1561 = vunpack.c.h.b16 %v674
    %v1562 = vunpack.c.l.b16 %v675
    %v1563 = vunpack.c.h.b16 %v675
    %v1564 = vunpack.c.l.b16 %v676
    %v1565 = vunpack.c.h.b16 %v676
    %v1566 = vunpack.c.l.b16 %v677
    %v1567 = vunpack.c.h.b16 %v677
    %v1568 = vunpack.c.l.b16 %v678
    %v1569 = vunpack.c.h.b16 %v678
    %v1570 = vunpack.c.l.b16 %v679
    %v1571 = vunpack.c.h.b16 %v679
    %v1572 = vunpack.c.l.b16 %v680
    %v1573 = vunpack.c.h.b16 %v680
    %v1574 = vunpack.c.l.b16 %v681
    %v1575 = vunpack.c.h.b16 %v681
    %v1576 = vunpack.c.l.b16 %v682
    %v1577 = vunpack.c.h.b16 %v682
    %v1578 = vunpack.c.l.b16 %v683
    %v1579 = vunpack.c.h.b16 %v683
    %v1580 = vunpack.c.l.b16 %v684
    %v1581 = vunpack.c.h.b16 %v684
    %v1582 = vunpack.c.l.b16 %v685
    %v1583 = vunpack.c.h.b16 %v685
    %v1584 = vunpack.c.l.b16 %v686
    %v1585 = vunpack.c.h.b16 %v686
    %v1586 = vunpack.c.l.b16 %v687
    %v1587 = vunpack.c.h.b16 %v687
    %v1588 = vunpack.c.l.b16 %v688
    %v1589 = vunpack.c.h.b16 %v688
    %v1590 = vunpack.c.l.b16 %v689
    %v1591 = vunpack.c.h.b16 %v689
    %v1592 = vunpack.c.l.b16 %v690
    %v1593 = vunpack.c.h.b16 %v690
    %v1594 = vunpack.c.l.b16 %v691
    %v1595 = vunpack.c.h.b16 %v691
    %v1596 = vunpack.c.l.b16 %v692
    %v1597 = vunpack.c.h.b16 %v692
    %v1598 = vunpack.c.l.b16 %v693
    %v1599 = vunpack.c.h.b16 %v693
    %v1600 = vunpack.c.l.b16 %v694
    %v1601 = vunpack.c.h.b16 %v694
    %v1602 = vunpack.c.l.b16 %v695
    %v1603 = vunpack.c.h.b16 %v695
    %v1604 = vunpack.c.l.b16 %v696
    %v1605 = vunpack.c.h.b16 %v696
    %v1606 = vunpack.c.l.b16 %v697
    %v1607 = vunpack.c.h.b16 %v697
    %v1608 = vunpack.c.l.b16 %v698
    %v1609 = vunpack.c.h.b16 %v698
    %v1610 = vunpack.c.l.b16 %v699
    %v1611 = vunpack.c.h.b16 %v699
    %v1612 = vunpack.c.l.b16 %v700
    %v1613 = vunpack.c.h.b16 %v700
    %v1614 = vunpack.c.l.b16 %v701
    %v1615 = vunpack.c.h.b16 %v701
    %v1616 = vunpack.c.l.b16 %v702
    %v1617 = vunpack.c.h.b16 %v702
    %v1618 = vunpack.c.l.b16 %v703
    %v1619 = vunpack.c.h.b16 %v703
    %v1620 = vunpack.c.l.b16 %v704
    %v1621 = vunpack.c.h.b16 %v704
    %v1622 = vunpack.c.l.b16 %v705
    %v1623 = vunpack.c.h.b16 %v705
    %v1624 = vunpack.c.l.b16 %v706
    %v1625 = vunpack.c.h.b16 %v706
    %v1626 = vunpack.c.l.b16 %v707
    %v1627 = vunpack.c.h.b16 %v707
    %v1628 = vunpack.c.l.b16 %v708
    %v1629 = vunpack.c.h.b16 %v708
    %v1630 = vunpack.c.l.b16 %v709
    %v1631 = vunpack.c.h.b16 %v709
    %v1632 = vunpack.c.l.b16 %v710
    %v1633 = vunpack.c.h.b16 %v710
    %v1634 = vunpack.c.l.b16 %v711
    %v1635 = vunpack.c.h.b16 %v711
    %v1636 = vunpack.c.l.b16 %v712
    %v1637 = vunpack.c.h.b16 %v712
    %v1638 = vunpack.c.l.b16 %v713
    %v1639 = vunpack.c.h.b16 %v713
    %v1640 = vunpack.c.l.b16 %v714
    %v1641 = vunpack.c.h.b16 %v714
    %v1642 = vunpack.c.l.b16 %v715
    %v1643 = vunpack.c.h.b16 %v715
    %v1644 = vunpack.c.l.b16 %v716
    %v1645 = vunpack.c.h.b16 %v716
    %v1646 = vunpack.c.l.b16 %v717
    %v1647 = vunpack.c.h.b16 %v717
    %v1648 = vunpack.c.l.b16 %v718
    %v1649 = vunpack.c.h.b16 %v718
    %v1650 = vunpack.c.l.b16 %v719
    %v1651 = vunpack.c.h.b16 %v719
    %v1652 = vunpack.c.l.b16 %v720
    %v1653 = vunpack.c.h.b16 %v720
    %v1654 = vunpack.c.l.b16 %v721
    %v1655 = vunpack.c.h.b16 %v721
    %v1656 = vunpack.c.l.b16 %v722
    %v1657 = vunpack.c.h.b16 %v722
    %v1658 = vunpack.c.l.b16 %v723
    %v1659 = vunpack.c.h.b16 %v723
    %v1660 = vunpack.c.l.b16 %v724
    %v1661 = vunpack.c.h.b16 %v724
    %v1662 = vunpack.c.l.b16 %v725
    %v1663 = vunpack.c.h.b16 %v725
    %v1664 = vunpack.c.l.b16 %v726
    %v1665 = vunpack.c.h.b16 %v726
    %v1666 = vunpack.c.l.b16 %v727
    %v1667 = vunpack.c.h.b16 %v727
    %v1668 = vunpack.c.l.b16 %v728
    %v1669 = vunpack.c.h.b16 %v728
    %v1670 = vunpack.c.l.b16 %v729
    %v1671 = vunpack.c.h.b16 %v729
    %v1672 = vunpack.c.l.b16 %v730
    %v1673 = vunpack.c.h.b16 %v730
    %v1674 = vunpack.c.l.b16 %v731
    %v1675 = vunpack.c.h.b16 %v731
    %v1676 = vunpack.c.l.b16 %v732
    %v1677 = vunpack.c.h.b16 %v732
    %v1678 = vunpack.c.l.b16 %v733
    %v1679 = vunpack.c.h.b16 %v733
    %v1680 = vunpack.c.l.b16 %v734
    %v1681 = vunpack.c.h.b16 %v734
    %v1682 = vunpack.c.l.b16 %v735
    %v1683 = vunpack.c.h.b16 %v735
    %v1684 = vunpack.c.l.b16 %v736
    %v1685 = vunpack.c.h.b16 %v736
    %v1686 = vunpack.c.l.b16 %v737
    %v1687 = vunpack.c.h.b16 %v737
    %v1688 = vunpack.c.l.b16 %v738
    %v1689 = vunpack.c.h.b16 %v738
    %v1690 = vunpack.c.l.b16 %v739
    %v1691 = vunpack.c.h.b16 %v739
    %v1692 = vunpack.c.l.b16 %v740
    %v1693 = vunpack.c.h.b16 %v740
    %v1694 = vunpack.c.l.b16 %v741
    %v1695 = vunpack.c.h.b16 %v741
    %v1696 = vunpack.c.l.b16 %v742
    %v1697 = vunpack.c.h.b16 %v742
    %v1698 = vunpack.c.l.b16 %v743
    %v1699 = vunpack.c.h.b16 %v743
    %v1700 = vunpack.c.l.b16 %v744
    %v1701 = vunpack.c.h.b16 %v744
    %v1702 = vunpack.c.l.b16 %v745
    %v1703 = vunpack.c.h.b16 %v745
    %v1704 = vunpack.c.l.b16 %v746
    %v1705 = vunpack.c.h.b16 %v746
    %v1706 = vunpack.c.l.b16 %v747
    %v1707 = vunpack.c.h.b16 %v747
    %v1708 = vunpack.c.l.b16 %v748
    %v1709 = vunpack.c.h.b16 %v748
    %v1710 = vunpack.c.l.b16 %v749
    %v1711 = vunpack.c.h.b16 %v749
    %v1712 = vunpack.c.l.b16 %v750
    %v1713 = vunpack.c.h.b16 %v750
    %v1714 = vunpack.c.l.b16 %v751
    %v1715 = vunpack.c.h.b16 %v751
    %v1716 = vunpack.c.l.b16 %v752
    %v1717 = vunpack.c.h.b16 %v752
    %v1718 = vunpack.c.l.b16 %v753
    %v1719 = vunpack.c.h.b16 %v753
    %v1720 = vunpack.c.l.b16 %v754
    %v1721 = vunpack.c.h.b16 %v754
    %v1722 = vunpack.c.l.b16 %v755
    %v1723 = vunpack.c.h.b16 %v755
    %v1724 = vunpack.c.l.b16 %v756
    %v1725 = vunpack.c.h.b16 %v756
    %v1726 = vunpack.c.l.b16 %v757
    %v1727 = vunpack.c.h.b16 %v757
    %v1728 = vunpack.c.l.b16 %v758
    %v1729 = vunpack.c.h.b16 %v758
    %v1730 = vunpack.c.l.b16 %v759
    %v1731 = vunpack.c.h.b16 %v759
    %v1732 = vunpack.c.l.b16 %v760
    %v1733 = vunpack.c.h.b16 %v760
    %v1734 = vunpack.c.l.b16 %v761
    %v1735 = vunpack.c.h.b16 %v761
    %v1736 = vunpack.c.l.b16 %v762
    %v1737 = vunpack.c.h.b16 %v762
    %v1738 = vunpack.c.l.b16 %v763
    %v1739 = vunpack.c.h.b16 %v763
    %v1740 = vunpack.c.l.b16 %v764
    %v1741 = vunpack.c.h.b16 %v764
    %v1742 = vunpack.c.l.b16 %v765
    %v1743 = vunpack.c.h.b16 %v765
    %v1744 = vunpack.c.l.b16 %v766
    %v1745 = vunpack.c.h.b16 %v766
    %v1746 = vunpack.c.l.b16 %v767
    %v1747 = vunpack.c.h.b16 %v767
    %v1748 = vunpack.c.l.b16 %v768
    %v1749 = vunpack.c.h.b16 %v768
    %v1750 = vunpack.c.l.b16 %v769
    %v1751 = vunpack.c.h.b16 %v769
    %v1752 = vunpack.c.l.b16 %v770
    %v1753 = vunpack.c.h.b16 %v770
    %v1754 = vunpack.c.l.b16 %v771
    %v1755 = vunpack.c.h.b16 %v771
    %v1756 = vunpack.c.l.b16 %v772
    %v1757 = vunpack.c.h.b16 %v772
    %v1758 = vunpack.c.l.b16 %v773
    %v1759 = vunpack.c.h.b16 %v773
    %v1760 = vunpack.c.l.b16 %v774
    %v1761 = vunpack.c.h.b16 %v774
    %v1762 = vunpack.c.l.b16 %v775
    %v1763 = vunpack.c.h.b16 %v775
    %v1764 = vunpack.c.l.b16 %v776
    %v1765 = vunpack.c.h.b16 %v776
    %v1766 = vunpack.c.l.b16 %v777
    %v1767 = vunpack.c.h.b16 %v777
    %v1768 = vunpack.c.l.b16 %v778
    %v1769 = vunpack.c.h.b16 %v778
    %v1770 = vunpack.c.l.b16 %v779
    %v1771 = vunpack.c.h.b16 %v779
    %v1772 = vunpack.c.l.b16 %v780
    %v1773 = vunpack.c.h.b16 %v780
    %v1774 = vunpack.c.l.b16 %v781
    %v1775 = vunpack.c.h.b16 %v781
    %v1776 = vunpack.c.l.b16 %v782
    %v1777 = vunpack.c.h.b16 %v782
    %v1778 = vunpack.c.l.b16 %v783
    %v1779 = vunpack.c.h.b16 %v783
    %v1780 = vunpack.c.l.b16 %v784
    %v1781 = vunpack.c.h.b16 %v784
    %v1782 = vunpack.c.l.b16 %v785
    %v1783 = vunpack.c.h.b16 %v785
    %v1784 = vunpack.c.l.b16 %v786
    %v1785 = vunpack.c.h.b16 %v786
    %v1786 = vunpack.c.l.b16 %v787
    %v1787 = vunpack.c.h.b16 %v787
    %v1788 = vunpack.c.l.b16 %v788
    %v1789 = vunpack.c.h.b16 %v788
    %v1790 = vunpack.c.l.b16 %v789
    %v1791 = vunpack.c.h.b16 %v789
    %v1792 = vpack.c.b16 %v1160, %v1152
    %v1793 = vpack.c.b16 %v1161, %v1153
    %v1794 = vpack.c.b16 %v1162, %v1154
    %v1795 = vpack.c.b16 %v1163, %v1155
    %v1796 = vpack.c.b16 %v1164, %v1156
    %v1797 = vpack.c.b16 %v1165, %v1157
    %v1798 = vpack.c.b16 %v1166, %v1158
    %v1799 = vpack.c.b16 %v1167, %v1159
    %v1800 = vpack.c.b16 %v1176, %v1168
    %v1801 = vpack.c.b16 %v1177, %v1169
    %v1802 = vpack.c.b16 %v1178, %v1170
    %v1803 = vpack.c.b16 %v1179, %v1171
    %v1804 = vpack.c.b16 %v1180, %v1172
    %v1805 = vpack.c.b16 %v1181, %v1173
    %v1806 = vpack.c.b16 %v1182, %v1174
    %v1807 = vpack.c.b16 %v1183, %v1175
    %v1808 = vpack.c.b16 %v1192, %v1184
    %v1809 = vpack.c.b16 %v1193, %v1185
    %v1810 = vpack.c.b16 %v1194, %v1186
    %v1811 = vpack.c.b16 %v1195, %v1187
    %v1812 = vpack.c.b16 %v1196, %v1188
    %v1813 = vpack.c.b16 %v1197, %v1189
    %v1814 = vpack.c.b16 %v1198, %v1190
    %v1815 = vpack.c.b16 %v1199, %v1191
    %v1816 = vpack.c.b16 %v1208, %v1200
    %v1817 = vpack.c.b16 %v1209, %v1201
    %v1818 = vpack.c.b16 %v1210, %v1202
    %v1819 = vpack.c.b16 %v1211, %v1203
    %v1820 = vpack.c.b16 %v1212, %v1204
    %v1821 = vpack.c.b16 %v1213, %v1205
    %v1822 = vpack.c.b16 %v1214, %v1206
    %v1823 = vpack.c.b16 %v1215, %v1207
    %v1824 = vpack.c.b16 %v1224, %v1216
    %v1825 = vpack.c.b16 %v1225, %v1217
    %v1826 = vpack.c.b16 %v1226, %v1218
    %v1827 = vpack.c.b16 %v1227, %v1219
    %v1828 = vpack.c.b16 %v1228, %v1220
    %v1829 = vpack.c.b16 %v1229, %v1221
    %v1830 = vpack.c.b16 %v1230, %v1222
    %v1831 = vpack.c.b16 %v1231, %v1223
    %v1832 = vpack.c.b16 %v1240, %v1232
    %v1833 = vpack.c.b16 %v1241, %v1233
    %v1834 = vpack.c.b16 %v1242, %v1234
    %v1835 = vpack.c.b16 %v1243, %v1235
    %v1836 = vpack.c.b16 %v1244, %v1236
    %v1837 = vpack.c.b16 %v1245, %v1237
    %v1838 = vpack.c.b16 %v1246, %v1238
    %v1839 = vpack.c.b16 %v1247, %v1239
    %v1840 = vpack.c.b16 %v1256, %v1248
    %v1841 = vpack.c.b16 %v1257, %v1249
    %v1842 = vpack.c.b16 %v1258, %v1250
    %v1843 = vpack.c.b16 %v1259, %v1251
    %v1844 = vpack.c.b16 %v1260, %v1252
    %v1845 = vpack.c.b16 %v1261, %v1253
    %v1846 = vpack.c.b16 %v1262, %v1254
    %v1847 = vpack.c.b16 %v1263, %v1255
    %v1848 = vpack.c.b16 %v1272, %v1264
    %v1849 = vpack.c.b16 %v1273, %v1265
    %v1850 = vpack.c.b16 %v1274, %v1266
    %v1851 = vpack.c.b16 %v1275, %v1267
    %v1852 = vpack.c.b16 %v1276, %v1268
    %v1853 = vpack.c.b16 %v1277, %v1269
    %v1854 = vpack.c.b16 %v1278, %v1270
    %v1855 = vpack.c.b16 %v1279, %v1271
    %v1856 = vpack.c.b16 %v1288, %v1280
    %v1857 = vpack.c.b16 %v1289, %v1281
    %v1858 = vpack.c.b16 %v1290, %v1282
    %v1859 = vpack.c.b16 %v1291, %v1283
    %v1860 = vpack.c.b16 %v1292, %v1284
    %v1861 = vpack.c.b16 %v1293, %v1285
    %v1862 = vpack.c.b16 %v1294, %v1286
    %v1863 = vpack.c.b16 %v1295, %v1287
    %v1864 = vpack.c.b16 %v1304, %v1296
    %v1865 = vpack.c.b16 %v1305, %v1297
    %v1866 = vpack.c.b16 %v1306, %v1298
    %v1867 = vpack.c.b16 %v1307, %v1299
    %v1868 = vpack.c.b16 %v1308, %v1300
    %v1869 = vpack.c.b16 %v1309, %v1301
    %v1870 = vpack.c.b16 %v1310, %v1302
    %v1871 = vpack.c.b16 %v1311, %v1303
    %v1872 = vpack.c.b16 %v1320, %v1312
    %v1873 = vpack.c.b16 %v1321, %v1313
    %v1874 = vpack.c.b16 %v1322, %v1314
    %v1875 = vpack.c.b16 %v1323, %v1315
    %v1876 = vpack.c.b16 %v1324, %v1316
    %v1877 = vpack.c.b16 %v1325, %v1317
    %v1878 = vpack.c.b16 %v1326, %v1318
    %v1879 = vpack.c.b16 %v1327, %v1319
    %v1880 = vpack.c.b16 %v1336, %v1328
    %v1881 = vpack.c.b16 %v1337, %v1329
    %v1882 = vpack.c.b16 %v1338, %v1330
    %v1883 = vpack.c.b16 %v1339, %v1331
    %v1884 = vpack.c.b16 %v1340, %v1332
    %v1885 = vpack.c.b16 %v1341, %v1333
    %v1886 = vpack.c.b16 %v1342, %v1334
    %v1887 = vpack.c.b16 %v1343, %v1335
    %v1888 = vpack.c.b16 %v1352, %v1344
    %v1889 = vpack.c.b16 %v1353, %v1345
    %v1890 = vpack.c.b16 %v1354, %v1346
    %v1891 = vpack.c.b16 %v1355, %v1347
    %v1892 = vpack.c.b16 %v1356, %v1348
    %v1893 = vpack.c.b16 %v1357, %v1349
    %v1894 = vpack.c.b16 %v1358, %v1350
    %v1895 = vpack.c.b16 %v1359, %v1351
    %v1896 = vpack.c.b16 %v1368, %v1360
    %v1897 = vpack.c.b16 %v1369, %v1361
    %v1898 = vpack.c.b16 %v1370, %v1362
    %v1899 = vpack.c.b16 %v1371, %v1363
    %v1900 = vpack.c.b16 %v1372, %v1364
    %v1901 = vpack.c.b16 %v1373, %v1365
    %v1902 = vpack.c.b16 %v1374, %v1366
    %v1903 = vpack.c.b16 %v1375, %v1367
    %v1904 = vpack.c.b16 %v1384, %v1376
    %v1905 = vpack.c.b16 %v1385, %v1377
    %v1906 = vpack.c.b16 %v1386, %v1378
    %v1907 = vpack.c.b16 %v1387, %v1379
    %v1908 = vpack.c.b16 %v1388, %v1380
    %v1909 = vpack.c.b16 %v1389, %v1381
    %v1910 = vpack.c.b16 %v1390, %v1382
    %v1911 = vpack.c.b16 %v1391, %v1383
    %v1912 = vpack.c.b16 %v1400, %v1392
    %v1913 = vpack.c.b16 %v1401, %v1393
    %v1914 = vpack.c.b16 %v1402, %v1394
    %v1915 = vpack.c.b16 %v1403, %v1395
    %v1916 = vpack.c.b16 %v1404, %v1396
    %v1917 = vpack.c.b16 %v1405, %v1397
    %v1918 = vpack.c.b16 %v1406, %v1398
    %v1919 = vpack.c.b16 %v1407, %v1399
    %v1920 = vpack.c.b16 %v1416, %v1408
    %v1921 = vpack.c.b16 %v1417, %v1409
    %v1922 = vpack.c.b16 %v1418, %v1410
    %v1923 = vpack.c.b16 %v1419, %v1411
    %v1924 = vpack.c.b16 %v1420, %v1412
    %v1925 = vpack.c.b16 %v1421, %v1413
    %v1926 = vpack.c.b16 %v1422, %v1414
    %v1927 = vpack.c.b16 %v1423, %v1415
    %v1928 = vpack.c.b16 %v1432, %v1424
    %v1929 = vpack.c.b16 %v1433, %v1425
    %v1930 = vpack.c.b16 %v1434, %v1426
    %v1931 = vpack.c.b16 %v1435, %v1427
    %v1932 = vpack.c.b16 %v1436, %v1428
    %v1933 = vpack.c.b16 %v1437, %v1429
    %v1934 = vpack.c.b16 %v1438, %v1430
    %v1935 = vpack.c.b16 %v1439, %v1431
    %v1936 = vpack.c.b16 %v1448, %v1440
    %v1937 = vpack.c.b16 %v1449, %v1441
    %v1938 = vpack.c.b16 %v1450, %v1442
    %v1939 = vpack.c.b16 %v1451, %v1443
    %v1940 = vpack.c.b16 %v1452, %v1444
    %v1941 = vpack.c.b16 %v1453, %v1445
    %v1942 = vpack.c.b16 %v1454, %v1446
    %v1943 = vpack.c.b16 %v1455, %v1447
    %v1944 = vpack.c.b16 %v1464, %v1456
    %v1945 = vpack.c.b16 %v1465, %v1457
    %v1946 = vpack.c.b16 %v1466, %v1458
    %v1947 = vpack.c.b16 %v1467, %v1459
    %v1948 = vpack.c.b16 %v1468, %v1460
    %v1949 = vpack.c.b16 %v1469, %v1461
    %v1950 = vpack.c.b16 %v1470, %v1462
    %v1951 = vpack.c.b16 %v1471, %v1463
    %v1952 = vpack.c.b16 %v1480, %v1472
    %v1953 = vpack.c.b16 %v1481, %v1473
    %v1954 = vpack.c.b16 %v1482, %v1474
    %v1955 = vpack.c.b16 %v1483, %v1475
    %v1956 = vpack.c.b16 %v1484, %v1476
    %v1957 = vpack.c.b16 %v1485, %v1477
    %v1958 = vpack.c.b16 %v1486, %v1478
    %v1959 = vpack.c.b16 %v1487, %v1479
    %v1960 = vpack.c.b16 %v1496, %v1488
    %v1961 = vpack.c.b16 %v1497, %v1489
    %v1962 = vpack.c.b16 %v1498, %v1490
    %v1963 = vpack.c.b16 %v1499, %v1491
    %v1964 = vpack.c.b16 %v1500, %v1492
    %v1965 = vpack.c.b16 %v1501, %v1493
    %v1966 = vpack.c.b16 %v1502, %v1494
    %v1967 = vpack.c.b16 %v1503, %v1495
    %v1968 = vpack.c.b16 %v1512, %v1504
    %v1969 = vpack.c.b16 %v1513, %v1505
    %v1970 = vpack.c.b16 %v1514, %v1506
    %v1971 = vpack.c.b16 %v1515, %v1507
    %v1972 = vpack.c.b16 %v1516, %v1508
    %v1973 = vpack.c.b16 %v1517, %v1509
    %v1974 = vpack.c.b16 %v1518, %v1510
    %v1975 = vpack.c.b16 %v1519, %v1511
    %v1976 = vpack.c.b16 %v1528, %v1520
    %v1977 = vpack.c.b16 %v1529, %v1521
    %v1978 = vpack.c.b16 %v1530, %v1522
    %v1979 = vpack.c.b16 %v1531, %v1523
    %v1980 = vpack.c.b16 %v1532, %v1524
    %v1981 = vpack.c.b16 %v1533, %v1525
    %v1982 = vpack.c.b16 %v1534, %v1526
    %v1983 = vpack.c.b16 %v1535, %v1527
    %v1984 = vpack.c.b16 %v1544, %v1536
    %v1985 = vpack.c.b16 %v1545, %v1537
    %v1986 = vpack.c.b16 %v1546, %v1538
    %v1987 = vpack.c.b16 %v1547, %v1539
    %v1988 = vpack.c.b16 %v1548, %v1540
    %v1989 = vpack.c.b16 %v1549, %v1541
    %v1990 = vpack.c.b16 %v1550, %v1542
    %v1991 = vpack.c.b16 %v1551, %v1543
    %v1992 = vpack.c.b16 %v1560, %v1552
    %v1993 = vpack.c.b16 %v1561, %v1553
    %v1994 = vpack.c.b16 %v1562, %v1554
    %v1995 = vpack.c.b16 %v1563, %v1555
    %v1996 = vpack.c.b16 %v1564, %v1556
    %v1997 = vpack.c.b16 %v1565, %v1557
    %v1998 = vpack.c.b16 %v1566, %v1558
    %v1999 = vpack.c.b16 %v1567, %v1559
    %v2000 = vpack.c.b16 %v1576, %v1568
    %v2001 = vpack.c.b16 %v1577, %v1569
    %v2002 = vpack.c.b16 %v1578, %v1570
    %v2003 = vpack.c.b16 %v1579, %v1571
    %v2004 = vpack.c.b16 %v1580, %v1572
    %v2005 = vpack.c.b16 %v1581, %v1573
    %v2006 = vpack.c.b16 %v1582, %v1574
    %v2007 = vpack.c.b16 %v1583, %v1575
    %v2008 = vpack.c.b16 %v1592, %v1584
    %v2009 = vpack.c.b16 %v1593, %v1585
    %v2010 = vpack.c.b16 %v1594, %v1586
    %v2011 = vpack.c.b16 %v1595, %v1587
    %v2012 = vpack.c.b16 %v1596, %v1588
    %v2013 = vpack.c.b16 %v1597, %v1589
    %v2014 = vpack.c.b16 %v1598, %v1590
    %v2015 = vpack.c.b16 %v1599, %v1591
    %v2016 = vpack.c.b16 %v1608, %v1600
    %v2017 = vpack.c.b16 %v1609, %v1601
    %v2018 = vpack.c.b16 %v1610, %v1602
    %v2019 = vpack.c.b16 %v1611, %v1603
    %v2020 = vpack.c.b16 %v1612, %v1604
    %v2021 = vpack.c.b16 %v1613, %v1605
    %v2022 = vpack.c.b16 %v1614, %v1606
    %v2023 = vpack.c.b16 %v1615, %v1607
    %v2024 = vpack.c.b16 %v1624, %v1616
    %v2025 = vpack.c.b16 %v1625, %v1617
    %v2026 = vpack.c.b16 %v1626, %v1618
    %v2027 = vpack.c.b16 %v1627, %v1619
    %v2028 = vpack.c.b16 %v1628, %v1620
    %v2029 = vpack.c.b16 %v1629, %v1621
    %v2030 = vpack.c.b16 %v1630, %v1622
    %v2031 = vpack.c.b16 %v1631, %v1623
    %v2032 = vpack.c.b16 %v1640, %v1632
    %v2033 = vpack.c.b16 %v1641, %v1633
    %v2034 = vpack.c.b16 %v1642, %v1634
    %v2035 = vpack.c.b16 %v1643, %v1635
    %v2036 = vpack.c.b16 %v1644, %v1636
    %v2037 = vpack.c.b16 %v1645, %v1637
    %v2038 = vpack.c.b16 %v1646, %v1638
    %v2039 = vpack.c.b16 %v1647, %v1639
    %v2040 = vpack.c.b16 %v1656, %v1648
    %v2041 = vpack.c.b16 %v1657, %v1649
    %v2042 = vpack.c.b16 %v1658, %v1650
    %v2043 = vpack.c.b16 %v1659, %v1651
    %v2044 = vpack.c.b16 %v1660, %v1652
    %v2045 = vpack.c.b16 %v1661, %v1653
    %v2046 = vpack.c.b16 %v1662, %v1654
    %v2047 = vpack.c.b16 %v1663, %v1655
    %v2048 = vpack.c.b16 %v1672, %v1664
    %v2049 = vpack.c.b16 %v1673, %v1665
    %v2050 = vpack.c.b16 %v1674, %v1666
    %v2051 = vpack.c.b16 %v1675, %v1667
    %v2052 = vpack.c.b16 %v1676, %v1668
    %v2053 = vpack.c.b16 %v1677, %v1669
    %v2054 = vpack.c.b16 %v1678, %v1670
    %v2055 = vpack.c.b16 %v1679, %v1671
    %v2056 = vpack.c.b16 %v1688, %v1680
    %v2057 = vpack.c.b16 %v1689, %v1681
    %v2058 = vpack.c.b16 %v1690, %v1682
    %v2059 = vpack.c.b16 %v1691, %v1683
    %v2060 = vpack.c.b16 %v1692, %v1684
    %v2061 = vpack.c.b16 %v1693, %v1685
    %v2062 = vpack.c.b16 %v1694, %v1686
    %v2063 = vpack.c.b16 %v1695, %v1687
    %v2064 = vpack.c.b16 %v1704, %v1696
    %v2065 = vpack.c.b16 %v1705, %v1697
    %v2066 = vpack.c.b16 %v1706, %v1698
    %v2067 = vpack.c.b16 %v1707, %v1699
    %v2068 = vpack.c.b16 %v1708, %v1700
    %v2069 = vpack.c.b16 %v1709, %v1701
    %v2070 = vpack.c.b16 %v1710, %v1702
    %v2071 = vpack.c.b16 %v1711, %v1703
    %v2072 = vpack.c.b16 %v1720, %v1712
    %v2073 = vpack.c.b16 %v1721, %v1713
    %v2074 = vpack.c.b16 %v1722, %v1714
    %v2075 = vpack.c.b16 %v1723, %v1715
    %v2076 = vpack.c.b16 %v1724, %v1716
    %v2077 = vpack.c.b16 %v1725, %v1717
    %v2078 = vpack.c.b16 %v1726, %v1718
    %v2079 = vpack.c.b16 %v1727, %v1719
    %v2080 = vpack.c.b16 %v1736, %v1728
    %v2081 = vpack.c.b16 %v1737, %v1729
    %v2082 = vpack.c.b16 %v1738, %v1730
    %v2083 = vpack.c.b16 %v1739, %v1731
    %v2084 = vpack.c.b16 %v1740, %v1732
    %v2085 = vpack.c.b16 %v1741, %v1733
    %v2086 = vpack.c.b16 %v1742, %v1734
    %v2087 = vpack.c.b16 %v1743, %v1735
    %v2088 = vpack.c.b16 %v1752, %v1744
    %v2089 = vpack.c.b16 %v1753, %v1745
    %v2090 = vpack.c.b16 %v1754, %v1746
    %v2091 = vpack.c.b16 %v1755, %v1747
    %v2092 = vpack.c.b16 %v1756, %v1748
    %v2093 = vpack.c.b16 %v1757, %v1749
    %v2094 = vpack.c.b16 %v1758, %v1750
    %v2095 = vpack.c.b16 %v1759, %v1751
    %v2096 = vpack.c.b16 %v1768, %v1760
    %v2097 = vpack.c.b16 %v1769, %v1761
    %v2098 = vpack.c.b16 %v1770, %v1762
    %v2099 = vpack.c.b16 %v1771, %v1763
    %v2100 = vpack.c.b16 %v1772, %v1764
    %v2101 = vpack.c.b16 %v1773, %v1765
    %v2102 = vpack.c.b16 %v1774, %v1766
    %v2103 = vpack.c.b16 %v1775, %v1767
    %v2104 = vpack.c.b16 %v1784, %v1776
    %v2105 = vpack.c.b16 %v1785, %v1777
    %v2106 = vpack.c.b16 %v1786, %v1778
    %v2107 = vpack.c.b16 %v1787, %v1779
    %v2108 = vpack.c.b16 %v1788, %v1780
    %v2109 = vpack.c.b16 %v1789, %v1781
    %v2110 = vpack.c.b16 %v1790, %v1782
    %v2111 = vpack.c.b16 %v1791, %v1783
    %2432 = vmatprep.subr.bf16.mxu0 %v1849
    %2433 = vmatpush1.bf16.msra.mxu0 %v1848
    %2434 = vmatprep.subr.bf16.mxu0 %v1841
    %2435 = vmatpush1.bf16.msra.mxu0 %v1840
    %2436 = vmatprep.subr.bf16.mxu0 %v1833
    %2437 = vmatpush1.bf16.msra.mxu0 %v1832
    %2438 = vmatprep.subr.bf16.mxu0 %v1825
    %2439 = vmatpush1.bf16.msra.mxu0 %v1824
    %2440 = vmatprep.subr.bf16.mxu0 %v1817
    %2441 = vmatpush1.bf16.msra.mxu0 %v1816
    %2442 = vmatprep.subr.bf16.mxu0 %v1809
    %2443 = vmatpush1.bf16.msra.mxu0 %v1808
    %2444 = vmatprep.subr.bf16.mxu0 %v1801
    %2445 = vmatpush1.bf16.msra.mxu0 %v1800
    %2446 = vmatprep.subr.bf16.mxu0 %v1793
    %2447 = vmatpush1.bf16.msra.mxu0 %v1792
    %2448 = vmatprep.subr.bf16.mxu0 %v1913
    %2449 = vmatpush2.bf16.msra.mxu0 %v1912
    %2450 = vmatprep.subr.bf16.mxu0 %v1905
    %2451 = vmatpush2.bf16.msra.mxu0 %v1904
    %2452 = vmatprep.subr.bf16.mxu0 %v1897
    %2453 = vmatpush2.bf16.msra.mxu0 %v1896
    %2454 = vmatprep.subr.bf16.mxu0 %v1889
    %2455 = vmatpush2.bf16.msra.mxu0 %v1888
    %2456 = vmatprep.subr.bf16.mxu0 %v1881
    %2457 = vmatpush2.bf16.msra.mxu0 %v1880
    %2458 = vmatprep.subr.bf16.mxu0 %v1873
    %2459 = vmatpush2.bf16.msra.mxu0 %v1872
    %2460 = vmatprep.subr.bf16.mxu0 %v1865
    %2461 = vmatpush2.bf16.msra.mxu0 %v1864
    %2462 = vmatprep.subr.bf16.mxu0 %v1857
    %2463 = vmatpush2.bf16.msra.mxu0 %v1856
    %2464 = vmatprep.mubr.bf16.mxu0 %v466
    %2465 = vmatmul.mubr.bf16.gmra.mxu0 %v465
    %v2466 = vpop.f32.mrf.mxu0
    %v2467 = vadd.f32 %v795, %v2466
    %v2468 = vpop.f32.mrf.mxu0
    %v2469 = vadd.f32 %v799, %v2468
    %v2470 = vpop.f32.mrf.mxu0
    %v2471 = vpop.f32.mrf.mxu0
    %2472 = vdwg.mxu0
    %2473 = vmatprep.subr.bf16.mxu0 %v1977
    %2474 = vmatpush1.bf16.msra.mxu0 %v1976
    %2475 = vmatprep.subr.bf16.mxu0 %v1969
    %2476 = vmatpush1.bf16.msra.mxu0 %v1968
    %2477 = vmatprep.subr.bf16.mxu0 %v1961
    %2478 = vmatpush1.bf16.msra.mxu0 %v1960
    %2479 = vmatprep.subr.bf16.mxu0 %v1953
    %2480 = vmatpush1.bf16.msra.mxu0 %v1952
    %2481 = vmatprep.subr.bf16.mxu0 %v1945
    %2482 = vmatpush1.bf16.msra.mxu0 %v1944
    %2483 = vmatprep.subr.bf16.mxu0 %v1937
    %2484 = vmatpush1.bf16.msra.mxu0 %v1936
    %2485 = vmatprep.subr.bf16.mxu0 %v1929
    %2486 = vmatpush1.bf16.msra.mxu0 %v1928
    %2487 = vmatprep.subr.bf16.mxu0 %v1921
    %2488 = vmatpush1.bf16.msra.mxu0 %v1920
    %2489 = vmatprep.subr.bf16.mxu0 %v2041
    %2490 = vmatpush2.bf16.msra.mxu0 %v2040
    %2491 = vmatprep.subr.bf16.mxu0 %v2033
    %2492 = vmatpush2.bf16.msra.mxu0 %v2032
    %2493 = vmatprep.subr.bf16.mxu0 %v2025
    %2494 = vmatpush2.bf16.msra.mxu0 %v2024
    %2495 = vmatprep.subr.bf16.mxu0 %v2017
    %2496 = vmatpush2.bf16.msra.mxu0 %v2016
    %2497 = vmatprep.subr.bf16.mxu0 %v2009
    %2498 = vmatpush2.bf16.msra.mxu0 %v2008
    %2499 = vmatprep.subr.bf16.mxu0 %v2001
    %2500 = vmatpush2.bf16.msra.mxu0 %v2000
    %2501 = vmatprep.subr.bf16.mxu0 %v1993
    %2502 = vmatpush2.bf16.msra.mxu0 %v1992
    %2503 = vmatprep.subr.bf16.mxu0 %v1985
    %2504 = vmatpush2.bf16.msra.mxu0 %v1984
    %2505 = vmatprep.mubr.bf16.mxu0 %v468
    %2506 = vmatmul.mubr.bf16.gmra.mxu0 %v467
    %v2507 = vpop.f32.mrf.mxu0
    %v2508 = vadd.f32 %v2467, %v2507
    %v2509 = vpop.f32.mrf.mxu0
    %v2510 = vadd.f32 %v2469, %v2509
    %v2511 = vpop.f32.mrf.mxu0
    %v2512 = vpop.f32.mrf.mxu0
    %2513 = vdwg.mxu0
    %2514 = vmatprep.subr.bf16.mxu0 %v2105
    %2515 = vmatpush1.bf16.msra.mxu0 %v2104
    %2516 = vmatprep.subr.bf16.mxu0 %v2097
    %2517 = vmatpush1.bf16.msra.mxu0 %v2096
    %2518 = vmatprep.subr.bf16.mxu0 %v2089
    %2519 = vmatpush1.bf16.msra.mxu0 %v2088
    %2520 = vmatprep.subr.bf16.mxu0 %v2081
    %2521 = vmatpush1.bf16.msra.mxu0 %v2080
    %2522 = vmatprep.subr.bf16.mxu0 %v2073
    %2523 = vmatpush1.bf16.msra.mxu0 %v2072
    %2524 = vmatprep.subr.bf16.mxu0 %v2065
    %2525 = vmatpush1.bf16.msra.mxu0 %v2064
    %2526 = vmatprep.subr.bf16.mxu0 %v2057
    %2527 = vmatpush1.bf16.msra.mxu0 %v2056
    %2528 = vmatprep.subr.bf16.mxu0 %v2049
    %2529 = vmatpush1.bf16.msra.mxu0 %v2048
    %2530 = vmatprep.subr.bf16.mxu0 0
    %2531 = vmatpush2.bf16.msra.mxu0 0
    %2532 = vmatprep.subr.bf16.mxu0 0
    %2533 = vmatpush2.bf16.msra.mxu0 0
    %2534 = vmatprep.subr.bf16.mxu0 0
    %2535 = vmatpush2.bf16.msra.mxu0 0
    %2536 = vmatprep.subr.bf16.mxu0 0
    %2537 = vmatpush2.bf16.msra.mxu0 0
    %2538 = vmatprep.subr.bf16.mxu0 0
    %2539 = vmatpush2.bf16.msra.mxu0 0
    %2540 = vmatprep.subr.bf16.mxu0 0
    %2541 = vmatpush2.bf16.msra.mxu0 0
    %2542 = vmatprep.subr.bf16.mxu0 0
    %2543 = vmatpush2.bf16.msra.mxu0 0
    %2544 = vmatprep.subr.bf16.mxu0 0
    %2545 = vmatpush2.bf16.msra.mxu0 0
    %2546 = vmatprep.mubr.bf16.mxu0 0
    %2547 = vmatmul.mubr.bf16.gmra.mxu0 %v469
    %v2548 = vpop.f32.mrf.mxu0
    %v2549 = vadd.f32 %v2508, %v2548
    %v2550 = vpop.f32.mrf.mxu0
    %v2551 = vadd.f32 %v2510, %v2550
    %v2552 = vpop.f32.mrf.mxu0
    %v2553 = vpop.f32.mrf.mxu0
    %2554 = vdwg.mxu0
    %2555 = vmatprep.subr.bf16.mxu0 %v1851
    %2556 = vmatpush1.bf16.msra.mxu0 %v1850
    %2557 = vmatprep.subr.bf16.mxu0 %v1843
    %2558 = vmatpush1.bf16.msra.mxu0 %v1842
    %2559 = vmatprep.subr.bf16.mxu0 %v1835
    %2560 = vmatpush1.bf16.msra.mxu0 %v1834
    %2561 = vmatprep.subr.bf16.mxu0 %v1827
    %2562 = vmatpush1.bf16.msra.mxu0 %v1826
    %2563 = vmatprep.subr.bf16.mxu0 %v1819
    %2564 = vmatpush1.bf16.msra.mxu0 %v1818
    %2565 = vmatprep.subr.bf16.mxu0 %v1811
    %2566 = vmatpush1.bf16.msra.mxu0 %v1810
    %2567 = vmatprep.subr.bf16.mxu0 %v1803
    %2568 = vmatpush1.bf16.msra.mxu0 %v1802
    %2569 = vmatprep.subr.bf16.mxu0 %v1795
    %2570 = vmatpush1.bf16.msra.mxu0 %v1794
    %2571 = vmatprep.subr.bf16.mxu0 %v1915
    %2572 = vmatpush2.bf16.msra.mxu0 %v1914
    %2573 = vmatprep.subr.bf16.mxu0 %v1907
    %2574 = vmatpush2.bf16.msra.mxu0 %v1906
    %2575 = vmatprep.subr.bf16.mxu0 %v1899
    %2576 = vmatpush2.bf16.msra.mxu0 %v1898
    %2577 = vmatprep.subr.bf16.mxu0 %v1891
    %2578 = vmatpush2.bf16.msra.mxu0 %v1890
    %2579 = vmatprep.subr.bf16.mxu0 %v1883
    %2580 = vmatpush2.bf16.msra.mxu0 %v1882
    %2581 = vmatprep.subr.bf16.mxu0 %v1875
    %2582 = vmatpush2.bf16.msra.mxu0 %v1874
    %2583 = vmatprep.subr.bf16.mxu0 %v1867
    %2584 = vmatpush2.bf16.msra.mxu0 %v1866
    %2585 = vmatprep.subr.bf16.mxu0 %v1859
    %2586 = vmatpush2.bf16.msra.mxu0 %v1858
    %2587 = vmatprep.mubr.bf16.mxu0 %v466
    %2588 = vmatmul.mubr.bf16.gmra.mxu0 %v465
    %v2589 = vpop.f32.mrf.mxu0
    %v2590 = vadd.f32 %v803, %v2589
    %v2591 = vpop.f32.mrf.mxu0
    %v2592 = vadd.f32 %v807, %v2591
    %v2593 = vpop.f32.mrf.mxu0
    %v2594 = vpop.f32.mrf.mxu0
    %2595 = vdwg.mxu0
    %2596 = vmatprep.subr.bf16.mxu0 %v1979
    %2597 = vmatpush1.bf16.msra.mxu0 %v1978
    %2598 = vmatprep.subr.bf16.mxu0 %v1971
    %2599 = vmatpush1.bf16.msra.mxu0 %v1970
    %2600 = vmatprep.subr.bf16.mxu0 %v1963
    %2601 = vmatpush1.bf16.msra.mxu0 %v1962
    %2602 = vmatprep.subr.bf16.mxu0 %v1955
    %2603 = vmatpush1.bf16.msra.mxu0 %v1954
    %2604 = vmatprep.subr.bf16.mxu0 %v1947
    %2605 = vmatpush1.bf16.msra.mxu0 %v1946
    %2606 = vmatprep.subr.bf16.mxu0 %v1939
    %2607 = vmatpush1.bf16.msra.mxu0 %v1938
    %2608 = vmatprep.subr.bf16.mxu0 %v1931
    %2609 = vmatpush1.bf16.msra.mxu0 %v1930
    %2610 = vmatprep.subr.bf16.mxu0 %v1923
    %2611 = vmatpush1.bf16.msra.mxu0 %v1922
    %2612 = vmatprep.subr.bf16.mxu0 %v2043
    %2613 = vmatpush2.bf16.msra.mxu0 %v2042
    %2614 = vmatprep.subr.bf16.mxu0 %v2035
    %2615 = vmatpush2.bf16.msra.mxu0 %v2034
    %2616 = vmatprep.subr.bf16.mxu0 %v2027
    %2617 = vmatpush2.bf16.msra.mxu0 %v2026
    %2618 = vmatprep.subr.bf16.mxu0 %v2019
    %2619 = vmatpush2.bf16.msra.mxu0 %v2018
    %2620 = vmatprep.subr.bf16.mxu0 %v2011
    %2621 = vmatpush2.bf16.msra.mxu0 %v2010
    %2622 = vmatprep.subr.bf16.mxu0 %v2003
    %2623 = vmatpush2.bf16.msra.mxu0 %v2002
    %2624 = vmatprep.subr.bf16.mxu0 %v1995
    %2625 = vmatpush2.bf16.msra.mxu0 %v1994
    %2626 = vmatprep.subr.bf16.mxu0 %v1987
    %2627 = vmatpush2.bf16.msra.mxu0 %v1986
    %2628 = vmatprep.mubr.bf16.mxu0 %v468
    %2629 = vmatmul.mubr.bf16.gmra.mxu0 %v467
    %v2630 = vpop.f32.mrf.mxu0
    %v2631 = vadd.f32 %v2590, %v2630
    %v2632 = vpop.f32.mrf.mxu0
    %v2633 = vadd.f32 %v2592, %v2632
    %v2634 = vpop.f32.mrf.mxu0
    %v2635 = vpop.f32.mrf.mxu0
    %2636 = vdwg.mxu0
    %2637 = vmatprep.subr.bf16.mxu0 %v2107
    %2638 = vmatpush1.bf16.msra.mxu0 %v2106
    %2639 = vmatprep.subr.bf16.mxu0 %v2099
    %2640 = vmatpush1.bf16.msra.mxu0 %v2098
    %2641 = vmatprep.subr.bf16.mxu0 %v2091
    %2642 = vmatpush1.bf16.msra.mxu0 %v2090
    %2643 = vmatprep.subr.bf16.mxu0 %v2083
    %2644 = vmatpush1.bf16.msra.mxu0 %v2082
    %2645 = vmatprep.subr.bf16.mxu0 %v2075
    %2646 = vmatpush1.bf16.msra.mxu0 %v2074
    %2647 = vmatprep.subr.bf16.mxu0 %v2067
    %2648 = vmatpush1.bf16.msra.mxu0 %v2066
    %2649 = vmatprep.subr.bf16.mxu0 %v2059
    %2650 = vmatpush1.bf16.msra.mxu0 %v2058
    %2651 = vmatprep.subr.bf16.mxu0 %v2051
    %2652 = vmatpush1.bf16.msra.mxu0 %v2050
    %2653 = vmatprep.subr.bf16.mxu0 0
    %2654 = vmatpush2.bf16.msra.mxu0 0
    %2655 = vmatprep.subr.bf16.mxu0 0
    %2656 = vmatpush2.bf16.msra.mxu0 0
    %2657 = vmatprep.subr.bf16.mxu0 0
    %2658 = vmatpush2.bf16.msra.mxu0 0
    %2659 = vmatprep.subr.bf16.mxu0 0
    %2660 = vmatpush2.bf16.msra.mxu0 0
    %2661 = vmatprep.subr.bf16.mxu0 0
    %2662 = vmatpush2.bf16.msra.mxu0 0
    %2663 = vmatprep.subr.bf16.mxu0 0
    %2664 = vmatpush2.bf16.msra.mxu0 0
    %2665 = vmatprep.subr.bf16.mxu0 0
    %2666 = vmatpush2.bf16.msra.mxu0 0
    %2667 = vmatprep.subr.bf16.mxu0 0
    %2668 = vmatpush2.bf16.msra.mxu0 0
    %2669 = vmatprep.mubr.bf16.mxu0 0
    %2670 = vmatmul.mubr.bf16.gmra.mxu0 %v469
    %v2671 = vpop.f32.mrf.mxu0
    %v2672 = vadd.f32 %v2631, %v2671
    %v2673 = vpop.f32.mrf.mxu0
    %v2674 = vadd.f32 %v2633, %v2673
    %v2675 = vpop.f32.mrf.mxu0
    %v2676 = vpop.f32.mrf.mxu0
    %2677 = vdwg.mxu0
    %2678 = vmatprep.subr.bf16.mxu0 %v1853
    %2679 = vmatpush1.bf16.msra.mxu0 %v1852
    %2680 = vmatprep.subr.bf16.mxu0 %v1845
    %2681 = vmatpush1.bf16.msra.mxu0 %v1844
    %2682 = vmatprep.subr.bf16.mxu0 %v1837
    %2683 = vmatpush1.bf16.msra.mxu0 %v1836
    %2684 = vmatprep.subr.bf16.mxu0 %v1829
    %2685 = vmatpush1.bf16.msra.mxu0 %v1828
    %2686 = vmatprep.subr.bf16.mxu0 %v1821
    %2687 = vmatpush1.bf16.msra.mxu0 %v1820
    %2688 = vmatprep.subr.bf16.mxu0 %v1813
    %2689 = vmatpush1.bf16.msra.mxu0 %v1812
    %2690 = vmatprep.subr.bf16.mxu0 %v1805
    %2691 = vmatpush1.bf16.msra.mxu0 %v1804
    %2692 = vmatprep.subr.bf16.mxu0 %v1797
    %2693 = vmatpush1.bf16.msra.mxu0 %v1796
    %2694 = vmatprep.subr.bf16.mxu0 %v1917
    %2695 = vmatpush2.bf16.msra.mxu0 %v1916
    %2696 = vmatprep.subr.bf16.mxu0 %v1909
    %2697 = vmatpush2.bf16.msra.mxu0 %v1908
    %2698 = vmatprep.subr.bf16.mxu0 %v1901
    %2699 = vmatpush2.bf16.msra.mxu0 %v1900
    %2700 = vmatprep.subr.bf16.mxu0 %v1893
    %2701 = vmatpush2.bf16.msra.mxu0 %v1892
    %2702 = vmatprep.subr.bf16.mxu0 %v1885
    %2703 = vmatpush2.bf16.msra.mxu0 %v1884
    %2704 = vmatprep.subr.bf16.mxu0 %v1877
    %2705 = vmatpush2.bf16.msra.mxu0 %v1876
    %2706 = vmatprep.subr.bf16.mxu0 %v1869
    %2707 = vmatpush2.bf16.msra.mxu0 %v1868
    %2708 = vmatprep.subr.bf16.mxu0 %v1861
    %2709 = vmatpush2.bf16.msra.mxu0 %v1860
    %2710 = vmatprep.mubr.bf16.mxu0 %v466
    %2711 = vmatmul.mubr.bf16.gmra.mxu0 %v465
    %v2712 = vpop.f32.mrf.mxu0
    %v2713 = vadd.f32 %v811, %v2712
    %v2714 = vpop.f32.mrf.mxu0
    %v2715 = vadd.f32 %v815, %v2714
    %v2716 = vpop.f32.mrf.mxu0
    %v2717 = vpop.f32.mrf.mxu0
    %2718 = vdwg.mxu0
    %2719 = vmatprep.subr.bf16.mxu0 %v1981
    %2720 = vmatpush1.bf16.msra.mxu0 %v1980
    %2721 = vmatprep.subr.bf16.mxu0 %v1973
    %2722 = vmatpush1.bf16.msra.mxu0 %v1972
    %2723 = vmatprep.subr.bf16.mxu0 %v1965
    %2724 = vmatpush1.bf16.msra.mxu0 %v1964
    %2725 = vmatprep.subr.bf16.mxu0 %v1957
    %2726 = vmatpush1.bf16.msra.mxu0 %v1956
    %2727 = vmatprep.subr.bf16.mxu0 %v1949
    %2728 = vmatpush1.bf16.msra.mxu0 %v1948
    %2729 = vmatprep.subr.bf16.mxu0 %v1941
    %2730 = vmatpush1.bf16.msra.mxu0 %v1940
    %2731 = vmatprep.subr.bf16.mxu0 %v1933
    %2732 = vmatpush1.bf16.msra.mxu0 %v1932
    %2733 = vmatprep.subr.bf16.mxu0 %v1925
    %2734 = vmatpush1.bf16.msra.mxu0 %v1924
    %2735 = vmatprep.subr.bf16.mxu0 %v2045
    %2736 = vmatpush2.bf16.msra.mxu0 %v2044
    %2737 = vmatprep.subr.bf16.mxu0 %v2037
    %2738 = vmatpush2.bf16.msra.mxu0 %v2036
    %2739 = vmatprep.subr.bf16.mxu0 %v2029
    %2740 = vmatpush2.bf16.msra.mxu0 %v2028
    %2741 = vmatprep.subr.bf16.mxu0 %v2021
    %2742 = vmatpush2.bf16.msra.mxu0 %v2020
    %2743 = vmatprep.subr.bf16.mxu0 %v2013
    %2744 = vmatpush2.bf16.msra.mxu0 %v2012
    %2745 = vmatprep.subr.bf16.mxu0 %v2005
    %2746 = vmatpush2.bf16.msra.mxu0 %v2004
    %2747 = vmatprep.subr.bf16.mxu0 %v1997
    %2748 = vmatpush2.bf16.msra.mxu0 %v1996
    %2749 = vmatprep.subr.bf16.mxu0 %v1989
    %2750 = vmatpush2.bf16.msra.mxu0 %v1988
    %2751 = vmatprep.mubr.bf16.mxu0 %v468
    %2752 = vmatmul.mubr.bf16.gmra.mxu0 %v467
    %v2753 = vpop.f32.mrf.mxu0
    %v2754 = vadd.f32 %v2713, %v2753
    %v2755 = vpop.f32.mrf.mxu0
    %v2756 = vadd.f32 %v2715, %v2755
    %v2757 = vpop.f32.mrf.mxu0
    %v2758 = vpop.f32.mrf.mxu0
    %2759 = vdwg.mxu0
    %2760 = vmatprep.subr.bf16.mxu0 %v2109
    %2761 = vmatpush1.bf16.msra.mxu0 %v2108
    %2762 = vmatprep.subr.bf16.mxu0 %v2101
    %2763 = vmatpush1.bf16.msra.mxu0 %v2100
    %2764 = vmatprep.subr.bf16.mxu0 %v2093
    %2765 = vmatpush1.bf16.msra.mxu0 %v2092
    %2766 = vmatprep.subr.bf16.mxu0 %v2085
    %2767 = vmatpush1.bf16.msra.mxu0 %v2084
    %2768 = vmatprep.subr.bf16.mxu0 %v2077
    %2769 = vmatpush1.bf16.msra.mxu0 %v2076
    %2770 = vmatprep.subr.bf16.mxu0 %v2069
    %2771 = vmatpush1.bf16.msra.mxu0 %v2068
    %2772 = vmatprep.subr.bf16.mxu0 %v2061
    %2773 = vmatpush1.bf16.msra.mxu0 %v2060
    %2774 = vmatprep.subr.bf16.mxu0 %v2053
    %2775 = vmatpush1.bf16.msra.mxu0 %v2052
    %2776 = vmatprep.subr.bf16.mxu0 0
    %2777 = vmatpush2.bf16.msra.mxu0 0
    %2778 = vmatprep.subr.bf16.mxu0 0
    %2779 = vmatpush2.bf16.msra.mxu0 0
    %2780 = vmatprep.subr.bf16.mxu0 0
    %2781 = vmatpush2.bf16.msra.mxu0 0
    %2782 = vmatprep.subr.bf16.mxu0 0
    %2783 = vmatpush2.bf16.msra.mxu0 0
    %2784 = vmatprep.subr.bf16.mxu0 0
    %2785 = vmatpush2.bf16.msra.mxu0 0
    %2786 = vmatprep.subr.bf16.mxu0 0
    %2787 = vmatpush2.bf16.msra.mxu0 0
    %2788 = vmatprep.subr.bf16.mxu0 0
    %2789 = vmatpush2.bf16.msra.mxu0 0
    %2790 = vmatprep.subr.bf16.mxu0 0
    %2791 = vmatpush2.bf16.msra.mxu0 0
    %2792 = vmatprep.mubr.bf16.mxu0 0
    %2793 = vmatmul.mubr.bf16.gmra.mxu0 %v469
    %v2794 = vpop.f32.mrf.mxu0
    %v2795 = vadd.f32 %v2754, %v2794
    %v2796 = vpop.f32.mrf.mxu0
    %v2797 = vadd.f32 %v2756, %v2796
    %v2798 = vpop.f32.mrf.mxu0
    %v2799 = vpop.f32.mrf.mxu0
    %2800 = vdwg.mxu0
    %2801 = vmatprep.subr.bf16.mxu0 %v1855
    %2802 = vmatpush1.bf16.msra.mxu0 %v1854
    %2803 = vmatprep.subr.bf16.mxu0 %v1847
    %2804 = vmatpush1.bf16.msra.mxu0 %v1846
    %2805 = vmatprep.subr.bf16.mxu0 %v1839
    %2806 = vmatpush1.bf16.msra.mxu0 %v1838
    %2807 = vmatprep.subr.bf16.mxu0 %v1831
    %2808 = vmatpush1.bf16.msra.mxu0 %v1830
    %2809 = vmatprep.subr.bf16.mxu0 %v1823
    %2810 = vmatpush1.bf16.msra.mxu0 %v1822
    %2811 = vmatprep.subr.bf16.mxu0 %v1815
    %2812 = vmatpush1.bf16.msra.mxu0 %v1814
    %2813 = vmatprep.subr.bf16.mxu0 %v1807
    %2814 = vmatpush1.bf16.msra.mxu0 %v1806
    %2815 = vmatprep.subr.bf16.mxu0 %v1799
    %2816 = vmatpush1.bf16.msra.mxu0 %v1798
    %2817 = vmatprep.subr.bf16.mxu0 %v1919
    %2818 = vmatpush2.bf16.msra.mxu0 %v1918
    %2819 = vmatprep.subr.bf16.mxu0 %v1911
    %2820 = vmatpush2.bf16.msra.mxu0 %v1910
    %2821 = vmatprep.subr.bf16.mxu0 %v1903
    %2822 = vmatpush2.bf16.msra.mxu0 %v1902
    %2823 = vmatprep.subr.bf16.mxu0 %v1895
    %2824 = vmatpush2.bf16.msra.mxu0 %v1894
    %2825 = vmatprep.subr.bf16.mxu0 %v1887
    %2826 = vmatpush2.bf16.msra.mxu0 %v1886
    %2827 = vmatprep.subr.bf16.mxu0 %v1879
    %2828 = vmatpush2.bf16.msra.mxu0 %v1878
    %2829 = vmatprep.subr.bf16.mxu0 %v1871
    %2830 = vmatpush2.bf16.msra.mxu0 %v1870
    %2831 = vmatprep.subr.bf16.mxu0 %v1863
    %2832 = vmatpush2.bf16.msra.mxu0 %v1862
    %2833 = vmatprep.mubr.bf16.mxu0 %v466
    %2834 = vmatmul.mubr.bf16.gmra.mxu0 %v465
    %v2835 = vpop.f32.mrf.mxu0
    %v2836 = vadd.f32 %v819, %v2835
    %v2837 = vpop.f32.mrf.mxu0
    %v2838 = vadd.f32 %v823, %v2837
    %v2839 = vpop.f32.mrf.mxu0
    %v2840 = vpop.f32.mrf.mxu0
    %2841 = vdwg.mxu0
    %2842 = vmatprep.subr.bf16.mxu0 %v1983
    %2843 = vmatpush1.bf16.msra.mxu0 %v1982
    %2844 = vmatprep.subr.bf16.mxu0 %v1975
    %2845 = vmatpush1.bf16.msra.mxu0 %v1974
    %2846 = vmatprep.subr.bf16.mxu0 %v1967
    %2847 = vmatpush1.bf16.msra.mxu0 %v1966
    %2848 = vmatprep.subr.bf16.mxu0 %v1959
    %2849 = vmatpush1.bf16.msra.mxu0 %v1958
    %2850 = vmatprep.subr.bf16.mxu0 %v1951
    %2851 = vmatpush1.bf16.msra.mxu0 %v1950
    %2852 = vmatprep.subr.bf16.mxu0 %v1943
    %2853 = vmatpush1.bf16.msra.mxu0 %v1942
    %2854 = vmatprep.subr.bf16.mxu0 %v1935
    %2855 = vmatpush1.bf16.msra.mxu0 %v1934
    %2856 = vmatprep.subr.bf16.mxu0 %v1927
    %2857 = vmatpush1.bf16.msra.mxu0 %v1926
    %2858 = vmatprep.subr.bf16.mxu0 %v2047
    %2859 = vmatpush2.bf16.msra.mxu0 %v2046
    %2860 = vmatprep.subr.bf16.mxu0 %v2039
    %2861 = vmatpush2.bf16.msra.mxu0 %v2038
    %2862 = vmatprep.subr.bf16.mxu0 %v2031
    %2863 = vmatpush2.bf16.msra.mxu0 %v2030
    %2864 = vmatprep.subr.bf16.mxu0 %v2023
    %2865 = vmatpush2.bf16.msra.mxu0 %v2022
    %2866 = vmatprep.subr.bf16.mxu0 %v2015
    %2867 = vmatpush2.bf16.msra.mxu0 %v2014
    %2868 = vmatprep.subr.bf16.mxu0 %v2007
    %2869 = vmatpush2.bf16.msra.mxu0 %v2006
    %2870 = vmatprep.subr.bf16.mxu0 %v1999
    %2871 = vmatpush2.bf16.msra.mxu0 %v1998
    %2872 = vmatprep.subr.bf16.mxu0 %v1991
    %2873 = vmatpush2.bf16.msra.mxu0 %v1990
    %2874 = vmatprep.mubr.bf16.mxu0 %v468
    %2875 = vmatmul.mubr.bf16.gmra.mxu0 %v467
    %v2876 = vpop.f32.mrf.mxu0
    %v2877 = vadd.f32 %v2836, %v2876
    %v2878 = vpop.f32.mrf.mxu0
    %v2879 = vadd.f32 %v2838, %v2878
    %v2880 = vpop.f32.mrf.mxu0
    %v2881 = vpop.f32.mrf.mxu0
    %2882 = vdwg.mxu0
    %2883 = vmatprep.subr.bf16.mxu0 %v2111
    %2884 = vmatpush1.bf16.msra.mxu0 %v2110
    %2885 = vmatprep.subr.bf16.mxu0 %v2103
    %2886 = vmatpush1.bf16.msra.mxu0 %v2102
    %2887 = vmatprep.subr.bf16.mxu0 %v2095
    %2888 = vmatpush1.bf16.msra.mxu0 %v2094
    %2889 = vmatprep.subr.bf16.mxu0 %v2087
    %2890 = vmatpush1.bf16.msra.mxu0 %v2086
    %2891 = vmatprep.subr.bf16.mxu0 %v2079
    %2892 = vmatpush1.bf16.msra.mxu0 %v2078
    %2893 = vmatprep.subr.bf16.mxu0 %v2071
    %2894 = vmatpush1.bf16.msra.mxu0 %v2070
    %2895 = vmatprep.subr.bf16.mxu0 %v2063
    %2896 = vmatpush1.bf16.msra.mxu0 %v2062
    %2897 = vmatprep.subr.bf16.mxu0 %v2055
    %2898 = vmatpush1.bf16.msra.mxu0 %v2054
    %2899 = vmatprep.subr.bf16.mxu0 0
    %2900 = vmatpush2.bf16.msra.mxu0 0
    %2901 = vmatprep.subr.bf16.mxu0 0
    %2902 = vmatpush2.bf16.msra.mxu0 0
    %2903 = vmatprep.subr.bf16.mxu0 0
    %2904 = vmatpush2.bf16.msra.mxu0 0
    %2905 = vmatprep.subr.bf16.mxu0 0
    %2906 = vmatpush2.bf16.msra.mxu0 0
    %2907 = vmatprep.subr.bf16.mxu0 0
    %2908 = vmatpush2.bf16.msra.mxu0 0
    %2909 = vmatprep.subr.bf16.mxu0 0
    %2910 = vmatpush2.bf16.msra.mxu0 0
    %2911 = vmatprep.subr.bf16.mxu0 0
    %2912 = vmatpush2.bf16.msra.mxu0 0
    %2913 = vmatprep.subr.bf16.mxu0 0
    %2914 = vmatpush2.bf16.msra.mxu0 0
    %2915 = vmatprep.mubr.bf16.mxu0 0
    %2916 = vmatmul.mubr.bf16.gmra.mxu0 %v469
    %v2917 = vpop.f32.mrf.mxu0
    %v2918 = vadd.f32 %v2877, %v2917
    %v2919 = vpop.f32.mrf.mxu0
    %v2920 = vadd.f32 %v2879, %v2919
    %v2921 = vpop.f32.mrf.mxu0
    %v2922 = vpop.f32.mrf.mxu0
    %2923 = vdwg.mxu0
    %2924 = vst [vmem:[#allocation12] sm:$0xff] %v2549
    %2925 = vst [vmem:[#allocation12 + $0x8] sm:$0xff] %v2551
    %2926 = vst [vmem:[#allocation12 + $0x10] sm:$0xff] %v2672
    %2927 = vst [vmem:[#allocation12 + $0x18] sm:$0xff] %v2674
    %2928 = vst [vmem:[#allocation12 + $0x20] sm:$0xff] %v2795
    %2929 = vst [vmem:[#allocation12 + $0x28] sm:$0xff] %v2797
    %2930 = vst [vmem:[#allocation12 + $0x30] sm:$0xff] %v2918
    %2931 = vst [vmem:[#allocation12 + $0x38] sm:$0xff] %v2920
    // Predicated region
    $region42: #{tpu_custom_call.1} parent=1 // pred_check
      _
    $region43: #{tpu_custom_call.1} parent=1 // pred_check_branch
      %2933 = sbr.rel (0) target = $region45
    $region44: #{tpu_custom_call.1} parent=1 // pred_region
      %s2935 = ssub.s32 1024, 1024
      %2936 = vsyncadd [#allocation4], %s2935
      %s2938 = sshll.u32 [#allocation12], 4
      %s2939 = int_to_ptr.vmem [resolvable:$true] %s2938
      %2941 = dma.vmem_to_hbm [thread:$0]  %s2939, 1024, %s5, [#allocation4]
    $region45: #{tpu_custom_call.1} parent=1 // pred_fallthru
      _
    // Predicated region
    $region46: #{tpu_custom_call.1} parent=1 // pred_check
      _
    $region47: #{tpu_custom_call.1} parent=1 // pred_check_branch
      %2943 = sbr.rel (0) target = $region49
    $region48: #{tpu_custom_call.1} parent=1 // pred_region
      %2944 = dma.done [#allocation4], 1024
    $region49: #{tpu_custom_call.1} parent=1 // pred_fallthru
      _
    %2945 = vsyncpa [#allocation3], 1
    %2946 = vsyncpa [#allocation10], 1
    %2947 = vsyncpa [#allocation4], 1
    %2948 = vsyncpa [#allocation5], 1
    %2949 = vsyncpa [#allocation8], 1

</llo_original>
